<compile_context>
chip_gen: v7x
topology: tpu7x:2x2x1
jax: 0.10.0
libtpu: 0.0.40
codegen_flags: <defaults>
</compile_context>

<pallas_src>
import jax
import jax.numpy as jnp
from jax.experimental import pallas as pl
from jax.experimental.pallas import tpu as pltpu

LANE = 128  # pad hidden dim to a full lane width -> lane-dense, unmasked stores


# ----------------------------------------------------------------------------
# Pallas kernel: the whole IntraAtt forward hot path for ONE graph
# (8 small matmuls + ReLU + residual add), grid axis = graph index.
# ----------------------------------------------------------------------------
def intra_att_kernel(x_ref, ohb_ref, sb_ref, ohm_ref, sm_ref, ahat_ref,
                     wu_ref, bu_ref, wg_ref, bg_ref,
                     fragx_ref, xout_ref):
    x = x_ref[...]                                                    # (N, Dp)

    # fragment segment means:  seg_b = Sb @ x            (F, Dp)
    seg_b = jnp.dot(sb_ref[...], x, preferred_element_type=jnp.float32)

    # MLP U[i-1] applied in SEGMENT space (ReLU commutes with the one-hot gather):
    #   u_seg = relu(seg_b @ Wu + bu)                    (F, Dp)
    u_seg = jnp.maximum(
        jnp.dot(seg_b, wu_ref[...], preferred_element_type=jnp.float32)
        + bu_ref[...], 0.0)

    # gather back + residual:  h = x + onehot_b @ u_seg  (N, Dp)
    h = x + jnp.dot(ohb_ref[...], u_seg, preferred_element_type=jnp.float32)

    # mapper segment means + GCN weight in segment space:
    #   seg_m = Sm @ h ; hw_seg = seg_m @ Wg ; msg = onehot_m @ hw_seg
    seg_m = jnp.dot(sm_ref[...], h, preferred_element_type=jnp.float32)      # (G, Dp)
    hw_seg = jnp.dot(seg_m, wg_ref[...], preferred_element_type=jnp.float32) # (G, Dp)
    msg = jnp.dot(ohm_ref[...], hw_seg, preferred_element_type=jnp.float32)  # (N, Dp)

    # GCN aggregation:  xg = Ahat @ msg + bg             (N, Dp)
    xg = jnp.dot(ahat_ref[...], msg, preferred_element_type=jnp.float32) + bg_ref[...]

    # fragment_x = scatter_mean(xg, batch_x)  ->  Sb @ xg (F, Dp)
    fragx_ref[...] = jnp.dot(sb_ref[...], xg, preferred_element_type=jnp.float32)
    xout_ref[...] = xg


def intra_att_pallas(x, ohb, sb, ohm, sm, ahat, wu, bu, wg, bg):
    """x: (B,N,Dp), ohb: (B,N,F), sb: (B,F,N), ohm: (B,N,G), sm: (B,G,N),
       ahat: (B,N,N); wu/wg: (Dp,Dp), bu/bg: (1,Dp).  Returns ((B,F,Dp),(B,N,Dp))."""
    B, N, Dp = x.shape
    F = sb.shape[1]
    G = sm.shape[1]

    def per_graph(arr):   # leading graph axis squeezed inside the kernel
        return pl.BlockSpec((None,) + arr.shape[1:], lambda b: (b, 0, 0))

    def shared(arr):      # weights / biases: same block every grid step
        return pl.BlockSpec(arr.shape, lambda b: (0, 0))

    in_specs = [per_graph(x), per_graph(ohb), per_graph(sb), per_graph(ohm),
                per_graph(sm), per_graph(ahat),
                shared(wu), shared(bu), shared(wg), shared(bg)]
    out_specs = (pl.BlockSpec((None, F, Dp), lambda b: (b, 0, 0)),
                 pl.BlockSpec((None, N, Dp), lambda b: (b, 0, 0)))

    # Advisory cost hint so XLA schedules the surrounding glue sensibly.
    flops = 2 * B * Dp * (F * N      # Sb @ x
                          + F * Dp   # seg_b @ Wu
                          + N * F    # onehot_b @ u_seg
                          + G * N    # Sm @ h
                          + G * Dp   # seg_m @ Wg
                          + N * G    # onehot_m @ hw_seg
                          + N * N    # Ahat @ msg
                          + F * N)   # Sb @ xg
    bytes_accessed = 4 * (x.size + ohb.size + sb.size + ohm.size + sm.size
                          + ahat.size + wu.size + bu.size + wg.size + bg.size
                          + B * F * Dp + B * N * Dp)

    return pl.pallas_call(
        intra_att_kernel,
        out_shape=(jax.ShapeDtypeStruct((B, F, Dp), jnp.float32),
                   jax.ShapeDtypeStruct((B, N, Dp), jnp.float32)),
        grid=(B,),
        in_specs=in_specs,
        out_specs=out_specs,
        compiler_params=pltpu.CompilerParams(dimension_semantics=("parallel",)),
        cost_estimate=pl.CostEstimate(flops=flops, transcendentals=0,
                                      bytes_accessed=bytes_accessed),
    )(x, ohb, sb, ohm, sm, ahat, wu, bu, wg, bg)


# ----------------------------------------------------------------------------
# Glue: skinny segment-mean factors, normalized adjacency, lane padding
# ----------------------------------------------------------------------------
def segment_mean_factors(idx, num_segments):
    """Returns (onehot, S): S @ x == scatter_mean(x, idx);
       onehot @ (S @ x) == scatter_mean(x, idx)[idx]."""
    onehot = jax.nn.one_hot(idx, num_segments, dtype=jnp.float32)      # (N, S)
    cnt = jnp.maximum(onehot.sum(axis=0), 1.0)                         # (S,)
    S = onehot.T / cnt[:, None]                                        # (S, N)
    return onehot, S


def gcn_normalized_adj(edge_index, num_nodes):
    """Dense D^-1/2 (A + I) D^-1/2 as used by PyG GCNConv (normalize=True).
       Duplicate / parallel edges accumulate (scatter-add), matching PyG."""
    src, dst = edge_index[0], edge_index[1]
    A = jnp.zeros((num_nodes, num_nodes), jnp.float32)
    A = A.at[dst, src].add(1.0)                                        # messages src -> dst
    diag = jnp.arange(num_nodes)
    A = A.at[diag, diag].add(1.0)                                      # appended self loops
    deg = A.sum(axis=1)
    dinv = jnp.where(deg > 0, 1.0 / jnp.sqrt(deg), 0.0)
    return dinv[:, None] * A * dinv[None, :]


def pad_lane(a, lane=LANE):
    """Zero-pad the last dim up to `lane` columns."""
    return jnp.pad(a, [(0, 0)] * (a.ndim - 1) + [(0, lane - a.shape[-1])])


def pad_weight(w, lane=LANE):
    """Zero-pad a (D,D) weight to (lane, lane)."""
    return jnp.pad(w, ((0, lane - w.shape[0]), (0, lane - w.shape[1])))


def intra_att_forward(xs, batch_xs, mappers, edge_indices, mapper_gather_first,
                      W_u, b_u, W_g, b_g, num_fragments, num_groups):
    """Batched forward. xs:(B,N,D), batch_xs/mappers:(B,N), edge_indices:(B,2,E2)."""
    B, N, D = xs.shape
    x_l, ohb_l, sb_l, ohm_l, sm_l, ah_l = [], [], [], [], [], []
    for b in range(B):
        x = xs[b]
        if mapper_gather_first:      # i == 0 branch: x = x[data.fragments_nodes_mapper]
            x = x[mappers[b]]
        ohb, Sb = segment_mean_factors(batch_xs[b], num_fragments)
        ohm, Sm = segment_mean_factors(mappers[b], num_groups)
        Ahat = gcn_normalized_adj(edge_indices[b], N)
        x_l.append(x); ohb_l.append(ohb); sb_l.append(Sb)
        ohm_l.append(ohm); sm_l.append(Sm); ah_l.append(Ahat)

    x_b = pad_lane(jnp.stack(x_l))                                     # (B, N, LANE)
    ohb_b, sb_b = jnp.stack(ohb_l), jnp.stack(sb_l)                    # (B,N,F), (B,F,N)
    ohm_b, sm_b = jnp.stack(ohm_l), jnp.stack(sm_l)                    # (B,N,G), (B,G,N)
    ah_b = jnp.stack(ah_l)                                             # (B, N, N)
    wu_p, wg_p = pad_weight(W_u), pad_weight(W_g)                      # (LANE, LANE)
    bu_p = pad_lane(b_u.reshape(1, -1))                                # (1, LANE)
    bg_p = pad_lane(b_g.reshape(1, -1))

    fragx_p, x_out_p = intra_att_pallas(x_b, ohb_b, sb_b, ohm_b, sm_b, ah_b,
                                        wu_p, bu_p, wg_p, bg_p)
    # padded lane columns are exactly zero (zero-padded weights/biases) -> slice off
    return fragx_p[:, :, :D], x_out_p[:, :, :D]


# ----------------------------------------------------------------------------
# Pure-JAX reference (single graph, for correctness check)
# ----------------------------------------------------------------------------
def reference_forward(x, batch_x, mapper, edge_index, W_u, b_u, W_g, b_g,
                      num_fragments, num_groups):
    def seg_mean(v, idx, n):
        s = jax.ops.segment_sum(v, idx, num_segments=n)
        c = jax.ops.segment_sum(jnp.ones((v.shape[0], 1), v.dtype), idx, num_segments=n)
        return s / jnp.maximum(c, 1.0)

    frag = seg_mean(x, batch_x, num_fragments)[batch_x]
    h = x + jax.nn.relu(frag @ W_u + b_u)
    h2 = seg_mean(h, mapper, num_groups)[mapper]
    Ahat = gcn_normalized_adj(edge_index, x.shape[0])
    xg = Ahat @ (h2 @ W_g) + b_g
    fragx = seg_mean(xg, batch_x, num_fragments)
    return fragx, xg


if __name__ == "__main__":
    B = 4                  # graphs per pallas_call (parallel grid axis)
    N, D = 64, 32          # nodes per graph, nhid (= nout for the GCN layer)
    F, G = 16, 32          # fragments (batch_x segments), mapper groups
    E = 64                 # undirected edges (doubled to both directions)

    key = jax.random.PRNGKey(0)
    kx, km, ks, kd, ku1, ku2, kg1 = jax.random.split(key, 7)

    xs = jax.random.normal(kx, (B, N, D), jnp.float32)
    batch_xs = jnp.tile(jnp.repeat(jnp.arange(F, dtype=jnp.int32), N // F)[None], (B, 1))
    mappers = jax.random.randint(km, (B, N), 0, G, jnp.int32)
    src = jax.random.randint(ks, (B, E), 0, N, jnp.int32)
    dst = jax.random.randint(kd, (B, E), 0, N, jnp.int32)
    edge_indices = jnp.stack([jnp.concatenate([src, dst], axis=1),
                              jnp.concatenate([dst, src], axis=1)], axis=1)  # (B, 2, 2E)

    # Deterministic parameter init (U[i-1] MLP linear; GCNConv linear + bias).
    W_u = jax.random.normal(ku1, (D, D), jnp.float32) * 0.1
    b_u = jax.random.normal(ku2, (D,), jnp.float32) * 0.1
    W_g = jax.random.normal(kg1, (D, D), jnp.float32) * 0.1
    b_g = jnp.zeros((D,), jnp.float32)                                 # GCNConv bias init = zeros

    i = 1  # uses U[i-1]; the i==0 mapper-gather path is also supported via glue
    frag_x, x_out = intra_att_forward(
        xs, batch_xs, mappers, edge_indices, mapper_gather_first=(i == 0),
        W_u=W_u, b_u=b_u, W_g=W_g, b_g=b_g,
        num_fragments=F, num_groups=G)
    jax.block_until_ready((frag_x, x_out))

    ref_fx, ref_x = [], []
    for b in range(B):
        fx, xr = reference_forward(xs[b], batch_xs[b], mappers[b], edge_indices[b],
                                   W_u, b_u, W_g, b_g, F, G)
        ref_fx.append(fx); ref_x.append(xr)
    ref_fx, ref_x = jnp.stack(ref_fx), jnp.stack(ref_x)

    assert frag_x.shape == (B, F, D) and x_out.shape == (B, N, D)
    assert jnp.allclose(frag_x, ref_fx, atol=1e-4, rtol=1e-4)
    assert jnp.allclose(x_out, ref_x, atol=1e-4, rtol=1e-4)

    # TODO(synk): MLP's BatchNorm is modeled as identity (eval mode, default running
    # stats); training-mode batch statistics are not reproduced.
    print("KERNEL_OK")
</pallas_src>

<mosaic_0001>
module attributes {stable_mosaic.version = 11 : i64} {
  func.func @intra_att_kernel(%arg0: i32, %arg1: memref<1x64x128xf32, #tpu.memory_space<vmem>>, %arg2: memref<1x64x16xf32, #tpu.memory_space<vmem>>, %arg3: memref<1x16x64xf32, #tpu.memory_space<vmem>>, %arg4: memref<1x64x32xf32, #tpu.memory_space<vmem>>, %arg5: memref<1x32x64xf32, #tpu.memory_space<vmem>>, %arg6: memref<1x64x64xf32, #tpu.memory_space<vmem>>, %arg7: memref<128x128xf32, #tpu.memory_space<vmem>>, %arg8: memref<1x128xf32, #tpu.memory_space<vmem>>, %arg9: memref<128x128xf32, #tpu.memory_space<vmem>>, %arg10: memref<1x128xf32, #tpu.memory_space<vmem>>, %arg11: memref<1x16x128xf32, #tpu.memory_space<vmem>>, %arg12: memref<1x64x128xf32, #tpu.memory_space<vmem>>) attributes {dimension_semantics = [#tpu.dimension_semantics<parallel>], iteration_bounds = array<i64: 4>, scalar_prefetch = 0 : i64, scratch_operands = 0 : i64, tpu.core_type = #tpu.core_type<tc>, window_params = [{transform_indices = @transform_0, window_bounds = array<i64: 1, 64, 128>}, {transform_indices = @transform_1, window_bounds = array<i64: 1, 64, 16>}, {transform_indices = @transform_2, window_bounds = array<i64: 1, 16, 64>}, {transform_indices = @transform_3, window_bounds = array<i64: 1, 64, 32>}, {transform_indices = @transform_4, window_bounds = array<i64: 1, 32, 64>}, {transform_indices = @transform_5, window_bounds = array<i64: 1, 64, 64>}, {pipeline_mode = #tpu.pipeline_mode<synchronous>, transform_indices = @transform_6, window_bounds = array<i64: 128, 128>}, {pipeline_mode = #tpu.pipeline_mode<synchronous>, transform_indices = @transform_7, window_bounds = array<i64: 1, 128>}, {pipeline_mode = #tpu.pipeline_mode<synchronous>, transform_indices = @transform_8, window_bounds = array<i64: 128, 128>}, {pipeline_mode = #tpu.pipeline_mode<synchronous>, transform_indices = @transform_9, window_bounds = array<i64: 1, 128>}, {transform_indices = @transform_10, window_bounds = array<i64: 1, 16, 128>}, {transform_indices = @transform_11, window_bounds = array<i64: 1, 64, 128>}]} {
    %c0 = arith.constant 0 : index
    %c0_0 = arith.constant 0 : index
    %c0_1 = arith.constant 0 : index
    %0 = vector.load %arg1[%c0, %c0_0, %c0_1] : memref<1x64x128xf32, #tpu.memory_space<vmem>>, vector<1x64x128xf32>
    %1 = vector.shape_cast %0 : vector<1x64x128xf32> to vector<64x128xf32>
    %c0_2 = arith.constant 0 : index
    %c0_3 = arith.constant 0 : index
    %c0_4 = arith.constant 0 : index
    %2 = vector.load %arg3[%c0_2, %c0_3, %c0_4] : memref<1x16x64xf32, #tpu.memory_space<vmem>>, vector<1x16x64xf32>
    %3 = vector.shape_cast %2 : vector<1x16x64xf32> to vector<16x64xf32>
    %cst = arith.constant dense<0.000000e+00> : vector<16x128xf32>
    %4 = tpu.matmul %3, %1, %cst {dimension_numbers = #tpu.dot_dimension_numbers<[1], [0], [0], [1], [0, 0, 1, 1], [], []>} : vector<16x64xf32>, vector<64x128xf32>, vector<16x128xf32> -> vector<16x128xf32>
    %c0_5 = arith.constant 0 : index
    %c0_6 = arith.constant 0 : index
    %5 = vector.load %arg7[%c0_5, %c0_6] : memref<128x128xf32, #tpu.memory_space<vmem>>, vector<128x128xf32>
    %cst_7 = arith.constant dense<0.000000e+00> : vector<16x128xf32>
    %6 = tpu.matmul %4, %5, %cst_7 {dimension_numbers = #tpu.dot_dimension_numbers<[1], [0], [0], [1], [0, 0, 1, 1], [], []>} : vector<16x128xf32>, vector<128x128xf32>, vector<16x128xf32> -> vector<16x128xf32>
    %c0_8 = arith.constant 0 : index
    %c0_9 = arith.constant 0 : index
    %7 = vector.load %arg8[%c0_8, %c0_9] : memref<1x128xf32, #tpu.memory_space<vmem>>, vector<1x128xf32>
    %8 = vector.broadcast %7 : vector<1x128xf32> to vector<16x128xf32>
    %9 = arith.addf %6, %8 : vector<16x128xf32>
    %cst_10 = arith.constant 0.000000e+00 : f32
    %10 = vector.broadcast %cst_10 : f32 to vector<16x128xf32>
    %11 = arith.maximumf %9, %10 : vector<16x128xf32>
    %c0_11 = arith.constant 0 : index
    %c0_12 = arith.constant 0 : index
    %c0_13 = arith.constant 0 : index
    %12 = vector.load %arg2[%c0_11, %c0_12, %c0_13] : memref<1x64x16xf32, #tpu.memory_space<vmem>>, vector<1x64x16xf32>
    %13 = vector.shape_cast %12 : vector<1x64x16xf32> to vector<64x16xf32>
    %cst_14 = arith.constant dense<0.000000e+00> : vector<64x128xf32>
    %14 = tpu.matmul %13, %11, %cst_14 {dimension_numbers = #tpu.dot_dimension_numbers<[1], [0], [0], [1], [0, 0, 1, 1], [], []>} : vector<64x16xf32>, vector<16x128xf32>, vector<64x128xf32> -> vector<64x128xf32>
    %15 = arith.addf %1, %14 : vector<64x128xf32>
    %c0_15 = arith.constant 0 : index
    %c0_16 = arith.constant 0 : index
    %c0_17 = arith.constant 0 : index
    %16 = vector.load %arg5[%c0_15, %c0_16, %c0_17] : memref<1x32x64xf32, #tpu.memory_space<vmem>>, vector<1x32x64xf32>
    %17 = vector.shape_cast %16 : vector<1x32x64xf32> to vector<32x64xf32>
    %cst_18 = arith.constant dense<0.000000e+00> : vector<32x128xf32>
    %18 = tpu.matmul %17, %15, %cst_18 {dimension_numbers = #tpu.dot_dimension_numbers<[1], [0], [0], [1], [0, 0, 1, 1], [], []>} : vector<32x64xf32>, vector<64x128xf32>, vector<32x128xf32> -> vector<32x128xf32>
    %c0_19 = arith.constant 0 : index
    %c0_20 = arith.constant 0 : index
    %19 = vector.load %arg9[%c0_19, %c0_20] : memref<128x128xf32, #tpu.memory_space<vmem>>, vector<128x128xf32>
    %cst_21 = arith.constant dense<0.000000e+00> : vector<32x128xf32>
    %20 = tpu.matmul %18, %19, %cst_21 {dimension_numbers = #tpu.dot_dimension_numbers<[1], [0], [0], [1], [0, 0, 1, 1], [], []>} : vector<32x128xf32>, vector<128x128xf32>, vector<32x128xf32> -> vector<32x128xf32>
    %c0_22 = arith.constant 0 : index
    %c0_23 = arith.constant 0 : index
    %c0_24 = arith.constant 0 : index
    %21 = vector.load %arg4[%c0_22, %c0_23, %c0_24] : memref<1x64x32xf32, #tpu.memory_space<vmem>>, vector<1x64x32xf32>
    %22 = vector.shape_cast %21 : vector<1x64x32xf32> to vector<64x32xf32>
    %cst_25 = arith.constant dense<0.000000e+00> : vector<64x128xf32>
    %23 = tpu.matmul %22, %20, %cst_25 {dimension_numbers = #tpu.dot_dimension_numbers<[1], [0], [0], [1], [0, 0, 1, 1], [], []>} : vector<64x32xf32>, vector<32x128xf32>, vector<64x128xf32> -> vector<64x128xf32>
    %c0_26 = arith.constant 0 : index
    %c0_27 = arith.constant 0 : index
    %c0_28 = arith.constant 0 : index
    %24 = vector.load %arg6[%c0_26, %c0_27, %c0_28] : memref<1x64x64xf32, #tpu.memory_space<vmem>>, vector<1x64x64xf32>
    %25 = vector.shape_cast %24 : vector<1x64x64xf32> to vector<64x64xf32>
    %cst_29 = arith.constant dense<0.000000e+00> : vector<64x128xf32>
    %26 = tpu.matmul %25, %23, %cst_29 {dimension_numbers = #tpu.dot_dimension_numbers<[1], [0], [0], [1], [0, 0, 1, 1], [], []>} : vector<64x64xf32>, vector<64x128xf32>, vector<64x128xf32> -> vector<64x128xf32>
    %c0_30 = arith.constant 0 : index
    %c0_31 = arith.constant 0 : index
    %27 = vector.load %arg10[%c0_30, %c0_31] : memref<1x128xf32, #tpu.memory_space<vmem>>, vector<1x128xf32>
    %28 = vector.broadcast %27 : vector<1x128xf32> to vector<64x128xf32>
    %29 = arith.addf %26, %28 : vector<64x128xf32>
    %c0_32 = arith.constant 0 : index
    %c0_33 = arith.constant 0 : index
    %c0_34 = arith.constant 0 : index
    %30 = vector.load %arg3[%c0_32, %c0_33, %c0_34] : memref<1x16x64xf32, #tpu.memory_space<vmem>>, vector<1x16x64xf32>
    %31 = vector.shape_cast %30 : vector<1x16x64xf32> to vector<16x64xf32>
    %cst_35 = arith.constant dense<0.000000e+00> : vector<16x128xf32>
    %32 = tpu.matmul %31, %29, %cst_35 {dimension_numbers = #tpu.dot_dimension_numbers<[1], [0], [0], [1], [0, 0, 1, 1], [], []>} : vector<16x64xf32>, vector<64x128xf32>, vector<16x128xf32> -> vector<16x128xf32>
    %c0_36 = arith.constant 0 : index
    %c0_37 = arith.constant 0 : index
    %c0_38 = arith.constant 0 : index
    %33 = vector.load %arg11[%c0_36, %c0_37, %c0_38] : memref<1x16x128xf32, #tpu.memory_space<vmem>>, vector<1x16x128xf32>
    %34 = vector.shape_cast %33 : vector<1x16x128xf32> to vector<16x128xf32>
    %35 = vector.shape_cast %32 : vector<16x128xf32> to vector<1x16x128xf32>
    tpu.vector_store %arg11[%c0_36, %c0_37, %c0_38], %35 {strides = array<i32>} : memref<1x16x128xf32, #tpu.memory_space<vmem>>, vector<1x16x128xf32>,
    %c0_39 = arith.constant 0 : index
    %c0_40 = arith.constant 0 : index
    %c0_41 = arith.constant 0 : index
    %36 = vector.load %arg12[%c0_39, %c0_40, %c0_41] : memref<1x64x128xf32, #tpu.memory_space<vmem>>, vector<1x64x128xf32>
    %37 = vector.shape_cast %36 : vector<1x64x128xf32> to vector<64x128xf32>
    %38 = vector.shape_cast %29 : vector<64x128xf32> to vector<1x64x128xf32>
    tpu.vector_store %arg12[%c0_39, %c0_40, %c0_41], %38 {strides = array<i32>} : memref<1x64x128xf32, #tpu.memory_space<vmem>>, vector<1x64x128xf32>,
    return
  }
  func.func @transform_0(%arg0: i32) -> (i32, i32, i32) {
    %c0_i32 = arith.constant 0 : i32
    %c0_i32_0 = arith.constant 0 : i32
    %c0_i32_1 = arith.constant 0 : i32
    return %arg0, %c0_i32, %c0_i32_0 : i32, i32, i32
  }
  func.func @transform_1(%arg0: i32) -> (i32, i32, i32) {
    %c0_i32 = arith.constant 0 : i32
    %c0_i32_0 = arith.constant 0 : i32
    %c0_i32_1 = arith.constant 0 : i32
    return %arg0, %c0_i32, %c0_i32_0 : i32, i32, i32
  }
  func.func @transform_2(%arg0: i32) -> (i32, i32, i32) {
    %c0_i32 = arith.constant 0 : i32
    %c0_i32_0 = arith.constant 0 : i32
    %c0_i32_1 = arith.constant 0 : i32
    return %arg0, %c0_i32, %c0_i32_0 : i32, i32, i32
  }
  func.func @transform_3(%arg0: i32) -> (i32, i32, i32) {
    %c0_i32 = arith.constant 0 : i32
    %c0_i32_0 = arith.constant 0 : i32
    %c0_i32_1 = arith.constant 0 : i32
    return %arg0, %c0_i32, %c0_i32_0 : i32, i32, i32
  }
  func.func @transform_4(%arg0: i32) -> (i32, i32, i32) {
    %c0_i32 = arith.constant 0 : i32
    %c0_i32_0 = arith.constant 0 : i32
    %c0_i32_1 = arith.constant 0 : i32
    return %arg0, %c0_i32, %c0_i32_0 : i32, i32, i32
  }
  func.func @transform_5(%arg0: i32) -> (i32, i32, i32) {
    %c0_i32 = arith.constant 0 : i32
    %c0_i32_0 = arith.constant 0 : i32
    %c0_i32_1 = arith.constant 0 : i32
    return %arg0, %c0_i32, %c0_i32_0 : i32, i32, i32
  }
  func.func @transform_6(%arg0: i32) -> (i32, i32) {
    %c0_i32 = arith.constant 0 : i32
    %c0_i32_0 = arith.constant 0 : i32
    %c0_i32_1 = arith.constant 0 : i32
    return %c0_i32, %c0_i32_0 : i32, i32
  }
  func.func @transform_7(%arg0: i32) -> (i32, i32) {
    %c0_i32 = arith.constant 0 : i32
    %c0_i32_0 = arith.constant 0 : i32
    %c0_i32_1 = arith.constant 0 : i32
    return %c0_i32, %c0_i32_0 : i32, i32
  }
  func.func @transform_8(%arg0: i32) -> (i32, i32) {
    %c0_i32 = arith.constant 0 : i32
    %c0_i32_0 = arith.constant 0 : i32
    %c0_i32_1 = arith.constant 0 : i32
    return %c0_i32, %c0_i32_0 : i32, i32
  }
  func.func @transform_9(%arg0: i32) -> (i32, i32) {
    %c0_i32 = arith.constant 0 : i32
    %c0_i32_0 = arith.constant 0 : i32
    %c0_i32_1 = arith.constant 0 : i32
    return %c0_i32, %c0_i32_0 : i32, i32
  }
  func.func @transform_10(%arg0: i32) -> (i32, i32, i32) {
    %c0_i32 = arith.constant 0 : i32
    %c0_i32_0 = arith.constant 0 : i32
    %c0_i32_1 = arith.constant 0 : i32
    return %arg0, %c0_i32, %c0_i32_0 : i32, i32, i32
  }
  func.func @transform_11(%arg0: i32) -> (i32, i32, i32) {
    %c0_i32 = arith.constant 0 : i32
    %c0_i32_0 = arith.constant 0 : i32
    %c0_i32_1 = arith.constant 0 : i32
    return %arg0, %c0_i32, %c0_i32_0 : i32, i32, i32
  }
}

</mosaic_0001>

<llo_original>
// kernel: tpu_custom_call.1
$region0: #{tpu_custom_call.1}
  #allocation0 [shape = 'u32[]', space=smem, size = 0x4, offset = 0x4, fixed_abs, tag = 'smem constant byte address 0x4 - core index']
  #allocation1 [shape = 'u32[144,128]{1,0:T(1,128)}', space=vmem, size = 0x12000, scoped, tag = 'internal scratch']
  %s0 = inlined_call_operand.vmem [shape: f32[4,64,128], index: 0, kind: input, shape index: {}]
  %s1 = inlined_call_operand.vmem [shape: f32[4,64,16], index: 1, kind: input, shape index: {}]
  %s2 = inlined_call_operand.vmem [shape: f32[4,16,64], index: 2, kind: input, shape index: {}]
  %s3 = inlined_call_operand.vmem [shape: f32[4,64,32], index: 3, kind: input, shape index: {}]
  %s4 = inlined_call_operand.hbm [shape: f32[4,32,64], index: 4, kind: input, shape index: {}]
  %s5 = inlined_call_operand.vmem [shape: f32[4,64,64], index: 5, kind: input, shape index: {}]
  %s6 = inlined_call_operand.hbm [shape: f32[128,128], index: 6, kind: input, shape index: {}]
  %s7 = inlined_call_operand.vmem [shape: f32[1,128], index: 7, kind: input, shape index: {}]
  %s8 = inlined_call_operand.hbm [shape: f32[128,128], index: 8, kind: input, shape index: {}]
  %s9 = inlined_call_operand.vmem [shape: f32[1,128], index: 9, kind: input, shape index: {}]
  %s10 = inlined_call_operand.hbm [shape: f32[4,16,128], index: 10, kind: output, shape index: {0}]
  %s11 = inlined_call_operand.hbm [shape: f32[4,64,128], index: 11, kind: output, shape index: {1}]
  %12 = xla_tuple %s10, %s11
  %s13 = sld [smem:[#allocation0]]
  $region93: #{tpu_custom_call.1} parent=0
    _
  %s15 = ssub.s32 1, %s13
  %s16 = scalar_select 0, %s15, %s13
  $region1: #{tpu_custom_call.1} parent=0
    #allocation2 [shape = 'u8[32768]{0}', space=vmem, size = 0x8000, scoped, tag = 'input window, operand 4']
    #allocation3 [shape = 's32[2]{0}', space=sflag, size = 0x8, scoped, tag = 'scoped memory for tpu_custom_call.1']
    #allocation4 [shape = 's32[2]{0}', space=sflag, size = 0x8, scoped, tag = 'scoped memory for tpu_custom_call.1']
    #allocation5 [shape = 'u8[65536]{0}', space=vmem, size = 0x10000, scoped, tag = 'input window, operand 6, single buffered']
    #allocation6 [shape = 's32[1]{0}', space=sflag, size = 0x4, scoped, tag = 'scoped memory for tpu_custom_call.1']
    #allocation7 [shape = 'u8[65536]{0}', space=vmem, size = 0x10000, scoped, tag = 'input window, operand 8, single buffered']
    #allocation8 [shape = 'u8[16384]{0}', space=vmem, size = 0x4000, scoped, tag = 'output window, operand 0']
    #allocation9 [shape = 'u8[65536]{0}', space=vmem, size = 0x10000, scoped, tag = 'output window, operand 1']
    #allocation10 [shape = 's32[2]{0}', space=sflag, size = 0x8, scoped, tag = 'scoped memory for tpu_custom_call.1']
    %17 = vsyncpa [#allocation3], 0
    %s18 = scalar_lea.sflag [#allocation3], 1
    %19 = vsyncpa %s18, 0
    %20 = vsyncpa [#allocation6], 0
    %21 = vsyncpa [#allocation4], 0
    %s22 = scalar_lea.sflag [#allocation4], 1
    %23 = vsyncpa %s22, 0
    %24 = vsyncpa [#allocation10], 0
    %s25 = scalar_lea.sflag [#allocation10], 1
    %26 = vsyncpa %s25, 0
    loop: start=0, step=1, limit=6
    $region2: #{tpu_custom_call.1} parent=1 // loop_pre_header
      _
    $region3: #{tpu_custom_call.1} parent=1 // loop_header
      %s28 = sphi 0, %s32
      %p29 = scmp.ge.s32.totalorder %s28, 6
      %s38 = sphi 0, %s40
      %s41 = sphi 0, %s38
      %s42 = sphi 0, %s41
      %s58 = sphi 0, %s42
      %s64 = sphi 0, %s66
      %s67 = sphi 0, %s64
      %s68 = sphi 0, %s67
      %s84 = sphi 0, %s68
      %s90 = sphi 0, %s92
      %s93 = sphi 0, %s90
      %s94 = sphi 0, %s93
      %s110 = sphi 0, %s94
      %s116 = sphi 0, %s118
      %s119 = sphi 0, %s116
      %s120 = sphi 0, %s119
      %s136 = sphi 0, %s120
      %s142 = sphi 0, %s144
      %s145 = sphi 0, %s142
      %s146 = sphi 0, %s145
      %s162 = sphi 0, %s146
      %s168 = sphi 0, %s170
      %s171 = sphi 0, %s168
      %s172 = sphi 0, %s171
      %s188 = sphi 0, %s172
      %s192 = sphi 0, %s192
      %s194 = sphi 0, %s192
      %s195 = sphi 0, %s194
      %s209 = sphi 0, %s195
      %s213 = sphi 0, %s213
      %s215 = sphi 0, %s213
      %s216 = sphi 0, %s215
      %s230 = sphi 0, %s216
      %s234 = sphi 0, %s234
      %s236 = sphi 0, %s234
      %s237 = sphi 0, %s236
      %s251 = sphi 0, %s237
      %s255 = sphi 0, %s255
      %s257 = sphi 0, %s255
      %s258 = sphi 0, %s257
      %s272 = sphi 0, %s258
      %s278 = sphi 0, %s280
      %s281 = sphi 0, %s278
      %s282 = sphi 0, %s281
      %s298 = sphi 0, %s282
      %s304 = sphi 0, %s306
      %s307 = sphi 0, %s304
      %s308 = sphi 0, %s307
      %s324 = sphi 0, %s308
    $region4: #{tpu_custom_call.1} parent=1 // loop_header_branch
      %31 = sbr.rel (%p29) target = $region8
    $region5: #{tpu_custom_call.1} parent=1 // loop_body
      %s33 = ssub.s32 %s28, 1
      %s34 = ssub.s32 %s28, 2
      %s35 = sadd.s32 %s28, 1
      %s36 = ssub.s32 %s28, %s35
      %p37 = scmp.eq.s32.totalorder %s36, 0
      %s39 = sadd.s32 %s38, 1
      %s40 = scalar_select %p37, %s38, %s39
      %p43 = pneg %p37
      %p44 = scmp.eq.s32.totalorder %s28, 3
      %p45 = por %p43, %p44
      %p46 = scmp.ne.s32.totalorder %s38, %s41
      %p47 = scmp.eq.s32.totalorder %s28, 0
      %p48 = por %p46, %p47
      %p49 = scmp.ne.s32.totalorder %s38, %s41
      %p50 = scmp.eq.s32.totalorder %s33, 3
      %p51 = por %p49, %p50
      %p52 = scmp.ne.s32.totalorder %s41, %s42
      %p53 = scmp.eq.s32.totalorder %s33, 0
      %p54 = por %p52, %p53
      %p55 = scmp.ne.s32.totalorder %s41, %s42
      %p56 = scmp.eq.s32.totalorder %s34, 3
      %p57 = por %p55, %p56
      %p59 = scmp.ne.s32.totalorder %s42, %s58
      %p60 = scmp.eq.s32.totalorder %s34, 0
      %p61 = por %p59, %p60
      %s62 = ssub.s32 %s28, %s35
      %p63 = scmp.eq.s32.totalorder %s62, 0
      %s65 = sadd.s32 %s64, 1
      %s66 = scalar_select %p63, %s64, %s65
      %p69 = pneg %p63
      %p70 = scmp.eq.s32.totalorder %s28, 3
      %p71 = por %p69, %p70
      %p72 = scmp.ne.s32.totalorder %s64, %s67
      %p73 = scmp.eq.s32.totalorder %s28, 0
      %p74 = por %p72, %p73
      %p75 = scmp.ne.s32.totalorder %s64, %s67
      %p76 = scmp.eq.s32.totalorder %s33, 3
      %p77 = por %p75, %p76
      %p78 = scmp.ne.s32.totalorder %s67, %s68
      %p79 = scmp.eq.s32.totalorder %s33, 0
      %p80 = por %p78, %p79
      %p81 = scmp.ne.s32.totalorder %s67, %s68
      %p82 = scmp.eq.s32.totalorder %s34, 3
      %p83 = por %p81, %p82
      %p85 = scmp.ne.s32.totalorder %s68, %s84
      %p86 = scmp.eq.s32.totalorder %s34, 0
      %p87 = por %p85, %p86
      %s88 = ssub.s32 %s28, %s35
      %p89 = scmp.eq.s32.totalorder %s88, 0
      %s91 = sadd.s32 %s90, 1
      %s92 = scalar_select %p89, %s90, %s91
      %p95 = pneg %p89
      %p96 = scmp.eq.s32.totalorder %s28, 3
      %p97 = por %p95, %p96
      %p98 = scmp.ne.s32.totalorder %s90, %s93
      %p99 = scmp.eq.s32.totalorder %s28, 0
      %p100 = por %p98, %p99
      %p101 = scmp.ne.s32.totalorder %s90, %s93
      %p102 = scmp.eq.s32.totalorder %s33, 3
      %p103 = por %p101, %p102
      %p104 = scmp.ne.s32.totalorder %s93, %s94
      %p105 = scmp.eq.s32.totalorder %s33, 0
      %p106 = por %p104, %p105
      %p107 = scmp.ne.s32.totalorder %s93, %s94
      %p108 = scmp.eq.s32.totalorder %s34, 3
      %p109 = por %p107, %p108
      %p111 = scmp.ne.s32.totalorder %s94, %s110
      %p112 = scmp.eq.s32.totalorder %s34, 0
      %p113 = por %p111, %p112
      %s114 = ssub.s32 %s28, %s35
      %p115 = scmp.eq.s32.totalorder %s114, 0
      %s117 = sadd.s32 %s116, 1
      %s118 = scalar_select %p115, %s116, %s117
      %p121 = pneg %p115
      %p122 = scmp.eq.s32.totalorder %s28, 3
      %p123 = por %p121, %p122
      %p124 = scmp.ne.s32.totalorder %s116, %s119
      %p125 = scmp.eq.s32.totalorder %s28, 0
      %p126 = por %p124, %p125
      %p127 = scmp.ne.s32.totalorder %s116, %s119
      %p128 = scmp.eq.s32.totalorder %s33, 3
      %p129 = por %p127, %p128
      %p130 = scmp.ne.s32.totalorder %s119, %s120
      %p131 = scmp.eq.s32.totalorder %s33, 0
      %p132 = por %p130, %p131
      %p133 = scmp.ne.s32.totalorder %s119, %s120
      %p134 = scmp.eq.s32.totalorder %s34, 3
      %p135 = por %p133, %p134
      %p137 = scmp.ne.s32.totalorder %s120, %s136
      %p138 = scmp.eq.s32.totalorder %s34, 0
      %p139 = por %p137, %p138
      %s140 = ssub.s32 %s28, %s35
      %p141 = scmp.eq.s32.totalorder %s140, 0
      %s143 = sadd.s32 %s142, 1
      %s144 = scalar_select %p141, %s142, %s143
      %p147 = pneg %p141
      %p148 = scmp.eq.s32.totalorder %s28, 3
      %p149 = por %p147, %p148
      %p150 = scmp.ne.s32.totalorder %s142, %s145
      %p151 = scmp.eq.s32.totalorder %s28, 0
      %p152 = por %p150, %p151
      %p153 = scmp.ne.s32.totalorder %s142, %s145
      %p154 = scmp.eq.s32.totalorder %s33, 3
      %p155 = por %p153, %p154
      %p156 = scmp.ne.s32.totalorder %s145, %s146
      %p157 = scmp.eq.s32.totalorder %s33, 0
      %p158 = por %p156, %p157
      %p159 = scmp.ne.s32.totalorder %s145, %s146
      %p160 = scmp.eq.s32.totalorder %s34, 3
      %p161 = por %p159, %p160
      %p163 = scmp.ne.s32.totalorder %s146, %s162
      %p164 = scmp.eq.s32.totalorder %s34, 0
      %p165 = por %p163, %p164
      %s166 = ssub.s32 %s28, %s35
      %p167 = scmp.eq.s32.totalorder %s166, 0
      %s169 = sadd.s32 %s168, 1
      %s170 = scalar_select %p167, %s168, %s169
      %p173 = pneg %p167
      %p174 = scmp.eq.s32.totalorder %s28, 3
      %p175 = por %p173, %p174
      %p176 = scmp.ne.s32.totalorder %s168, %s171
      %p177 = scmp.eq.s32.totalorder %s28, 0
      %p178 = por %p176, %p177
      %p179 = scmp.ne.s32.totalorder %s168, %s171
      %p180 = scmp.eq.s32.totalorder %s33, 3
      %p181 = por %p179, %p180
      %p182 = scmp.ne.s32.totalorder %s171, %s172
      %p183 = scmp.eq.s32.totalorder %s33, 0
      %p184 = por %p182, %p183
      %p185 = scmp.ne.s32.totalorder %s171, %s172
      %p186 = scmp.eq.s32.totalorder %s34, 3
      %p187 = por %p185, %p186
      %p189 = scmp.ne.s32.totalorder %s172, %s188
      %p190 = scmp.eq.s32.totalorder %s34, 0
      %p191 = por %p189, %p190
      %s193 = sadd.s32 %s192, 1
      %p196 = scmp.eq.s32.totalorder %s28, 3
      %p197 = scmp.ne.s32.totalorder %s192, %s194
      %p198 = scmp.eq.s32.totalorder %s28, 0
      %p199 = por %p197, %p198
      %p200 = scmp.ne.s32.totalorder %s192, %s194
      %p201 = scmp.eq.s32.totalorder %s33, 3
      %p202 = por %p200, %p201
      %p203 = scmp.ne.s32.totalorder %s194, %s195
      %p204 = scmp.eq.s32.totalorder %s33, 0
      %p205 = por %p203, %p204
      %p206 = scmp.ne.s32.totalorder %s194, %s195
      %p207 = scmp.eq.s32.totalorder %s34, 3
      %p208 = por %p206, %p207
      %p210 = scmp.ne.s32.totalorder %s195, %s209
      %p211 = scmp.eq.s32.totalorder %s34, 0
      %p212 = por %p210, %p211
      %s214 = sadd.s32 %s213, 1
      %p217 = scmp.eq.s32.totalorder %s28, 3
      %p218 = scmp.ne.s32.totalorder %s213, %s215
      %p219 = scmp.eq.s32.totalorder %s28, 0
      %p220 = por %p218, %p219
      %p221 = scmp.ne.s32.totalorder %s213, %s215
      %p222 = scmp.eq.s32.totalorder %s33, 3
      %p223 = por %p221, %p222
      %p224 = scmp.ne.s32.totalorder %s215, %s216
      %p225 = scmp.eq.s32.totalorder %s33, 0
      %p226 = por %p224, %p225
      %p227 = scmp.ne.s32.totalorder %s215, %s216
      %p228 = scmp.eq.s32.totalorder %s34, 3
      %p229 = por %p227, %p228
      %p231 = scmp.ne.s32.totalorder %s216, %s230
      %p232 = scmp.eq.s32.totalorder %s34, 0
      %p233 = por %p231, %p232
      %s235 = sadd.s32 %s234, 1
      %p238 = scmp.eq.s32.totalorder %s28, 3
      %p239 = scmp.ne.s32.totalorder %s234, %s236
      %p240 = scmp.eq.s32.totalorder %s28, 0
      %p241 = por %p239, %p240
      %p242 = scmp.ne.s32.totalorder %s234, %s236
      %p243 = scmp.eq.s32.totalorder %s33, 3
      %p244 = por %p242, %p243
      %p245 = scmp.ne.s32.totalorder %s236, %s237
      %p246 = scmp.eq.s32.totalorder %s33, 0
      %p247 = por %p245, %p246
      %p248 = scmp.ne.s32.totalorder %s236, %s237
      %p249 = scmp.eq.s32.totalorder %s34, 3
      %p250 = por %p248, %p249
      %p252 = scmp.ne.s32.totalorder %s237, %s251
      %p253 = scmp.eq.s32.totalorder %s34, 0
      %p254 = por %p252, %p253
      %s256 = sadd.s32 %s255, 1
      %p259 = scmp.eq.s32.totalorder %s28, 3
      %p260 = scmp.ne.s32.totalorder %s255, %s257
      %p261 = scmp.eq.s32.totalorder %s28, 0
      %p262 = por %p260, %p261
      %p263 = scmp.ne.s32.totalorder %s255, %s257
      %p264 = scmp.eq.s32.totalorder %s33, 3
      %p265 = por %p263, %p264
      %p266 = scmp.ne.s32.totalorder %s257, %s258
      %p267 = scmp.eq.s32.totalorder %s33, 0
      %p268 = por %p266, %p267
      %p269 = scmp.ne.s32.totalorder %s257, %s258
      %p270 = scmp.eq.s32.totalorder %s34, 3
      %p271 = por %p269, %p270
      %p273 = scmp.ne.s32.totalorder %s258, %s272
      %p274 = scmp.eq.s32.totalorder %s34, 0
      %p275 = por %p273, %p274
      %s276 = ssub.s32 %s28, %s35
      %p277 = scmp.eq.s32.totalorder %s276, 0
      %s279 = sadd.s32 %s278, 1
      %s280 = scalar_select %p277, %s278, %s279
      %p283 = pneg %p277
      %p284 = scmp.eq.s32.totalorder %s28, 3
      %p285 = por %p283, %p284
      %p286 = scmp.ne.s32.totalorder %s278, %s281
      %p287 = scmp.eq.s32.totalorder %s28, 0
      %p288 = por %p286, %p287
      %p289 = scmp.ne.s32.totalorder %s278, %s281
      %p290 = scmp.eq.s32.totalorder %s33, 3
      %p291 = por %p289, %p290
      %p292 = scmp.ne.s32.totalorder %s281, %s282
      %p293 = scmp.eq.s32.totalorder %s33, 0
      %p294 = por %p292, %p293
      %p295 = scmp.ne.s32.totalorder %s281, %s282
      %p296 = scmp.eq.s32.totalorder %s34, 3
      %p297 = por %p295, %p296
      %p299 = scmp.ne.s32.totalorder %s282, %s298
      %p300 = scmp.eq.s32.totalorder %s34, 0
      %p301 = por %p299, %p300
      %s302 = ssub.s32 %s28, %s35
      %p303 = scmp.eq.s32.totalorder %s302, 0
      %s305 = sadd.s32 %s304, 1
      %s306 = scalar_select %p303, %s304, %s305
      %p309 = pneg %p303
      %p310 = scmp.eq.s32.totalorder %s28, 3
      %p311 = por %p309, %p310
      %p312 = scmp.ne.s32.totalorder %s304, %s307
      %p313 = scmp.eq.s32.totalorder %s28, 0
      %p314 = por %p312, %p313
      %p315 = scmp.ne.s32.totalorder %s304, %s307
      %p316 = scmp.eq.s32.totalorder %s33, 3
      %p317 = por %p315, %p316
      %p318 = scmp.ne.s32.totalorder %s307, %s308
      %p319 = scmp.eq.s32.totalorder %s33, 0
      %p320 = por %p318, %p319
      %p321 = scmp.ne.s32.totalorder %s307, %s308
      %p322 = scmp.eq.s32.totalorder %s34, 3
      %p323 = por %p321, %p322
      %p325 = scmp.ne.s32.totalorder %s308, %s324
      %p326 = scmp.eq.s32.totalorder %s34, 0
      %p327 = por %p325, %p326
      %p328 = scmp.le.s32.totalorder 1, %s28
      %p329 = scmp.lt.s32.totalorder %s28, 5
      %p330 = pnand %p328, %p329
      %p331 = pneg %p330
      // Predicated region
      $region9: #{tpu_custom_call.1} parent=5 // pred_check
        _
      $region10: #{tpu_custom_call.1} parent=5 // pred_check_branch
        %333 = sbr.rel (%p330) target = $region12
      $region11: #{tpu_custom_call.1} parent=5 // pred_region
        %s334 = ssub.s32 %s28, 1
        // Predicated region
        $region13: #{tpu_custom_call.1} parent=11 // pred_check
          %p335 = pneg %p205
        $region14: #{tpu_custom_call.1} parent=11 // pred_check_branch
          %337 = sbr.rel (%p335) target = $region16
        $region15: #{tpu_custom_call.1} parent=11 // pred_region
          %s339 = ssub.s32 2048, 2048
          %340 = vsyncadd [#allocation6], %s339
          %s341 = sshll.u32 [#allocation5], 4
          %s342 = int_to_ptr.vmem [resolvable:$true] %s341
          %347 = dma.hbm_to_vmem [thread:$0]  %s6, 2048, %s342, [#allocation6], 128, 128, 8
        $region16: #{tpu_custom_call.1} parent=11 // pred_fallthru
          _
        // Predicated region
        $region17: #{tpu_custom_call.1} parent=11 // pred_check
          %p348 = pneg %p226
        $region18: #{tpu_custom_call.1} parent=11 // pred_check_branch
          %350 = sbr.rel (%p348) target = $region20
        $region19: #{tpu_custom_call.1} parent=11 // pred_region
          _
        $region20: #{tpu_custom_call.1} parent=11 // pred_fallthru
          _
        // Predicated region
        $region21: #{tpu_custom_call.1} parent=11 // pred_check
          %p351 = pneg %p247
        $region22: #{tpu_custom_call.1} parent=11 // pred_check_branch
          %353 = sbr.rel (%p351) target = $region24
        $region23: #{tpu_custom_call.1} parent=11 // pred_region
          %s355 = ssub.s32 2048, 2048
          %356 = vsyncadd [#allocation6], %s355
          %s357 = sshll.u32 [#allocation7], 4
          %s358 = int_to_ptr.vmem [resolvable:$true] %s357
          %363 = dma.hbm_to_vmem [thread:$0]  %s8, 2048, %s358, [#allocation6], 128, 128, 8
        $region24: #{tpu_custom_call.1} parent=11 // pred_fallthru
          _
        // Predicated region
        $region25: #{tpu_custom_call.1} parent=11 // pred_check
          %p364 = pneg %p268
        $region26: #{tpu_custom_call.1} parent=11 // pred_check_branch
          %366 = sbr.rel (%p364) target = $region28
        $region27: #{tpu_custom_call.1} parent=11 // pred_region
          _
        $region28: #{tpu_custom_call.1} parent=11 // pred_fallthru
          _
      $region12: #{tpu_custom_call.1} parent=5 // pred_fallthru
        _
      %p367 = scmp.lt.s32.totalorder %s28, 4
      // Predicated region
      $region29: #{tpu_custom_call.1} parent=5 // pred_check
        %p368 = pneg %p367
      $region30: #{tpu_custom_call.1} parent=5 // pred_check_branch
        %370 = sbr.rel (%p368) target = $region32
      $region31: #{tpu_custom_call.1} parent=5 // pred_region
        // Predicated region
        $region33: #{tpu_custom_call.1} parent=31 // pred_check
          %p371 = pneg %p48
        $region34: #{tpu_custom_call.1} parent=31 // pred_check_branch
          %373 = sbr.rel (%p371) target = $region36
        $region35: #{tpu_custom_call.1} parent=31 // pred_region
          %p374 = scmp.lt.s32.totalorder %s28, 3
          %s375 = scalar_select %p374, %s28, 3
          %s376 = smul.addr %s375, 8
          %s377 = smul.addr %s376, 8
          %s378 = scalar_lea.vmem %s0, %s377
        $region36: #{tpu_custom_call.1} parent=31 // pred_fallthru
          _
        // Predicated region
        $region37: #{tpu_custom_call.1} parent=31 // pred_check
          %p379 = pneg %p74
        $region38: #{tpu_custom_call.1} parent=31 // pred_check_branch
          %381 = sbr.rel (%p379) target = $region40
        $region39: #{tpu_custom_call.1} parent=31 // pred_region
          %p382 = scmp.lt.s32.totalorder %s28, 3
          %s383 = scalar_select %p382, %s28, 3
          %s384 = smul.addr %s383, 8
          %s385 = smul.addr %s384, 8
          %s386 = scalar_lea.vmem %s1, %s385
        $region40: #{tpu_custom_call.1} parent=31 // pred_fallthru
          _
        // Predicated region
        $region41: #{tpu_custom_call.1} parent=31 // pred_check
          %p387 = pneg %p100
        $region42: #{tpu_custom_call.1} parent=31 // pred_check_branch
          %389 = sbr.rel (%p387) target = $region44
        $region43: #{tpu_custom_call.1} parent=31 // pred_region
          %p390 = scmp.lt.s32.totalorder %s28, 3
          %s391 = scalar_select %p390, %s28, 3
          %s392 = smul.addr %s391, 2
          %s393 = smul.addr %s392, 8
          %s394 = scalar_lea.vmem %s2, %s393
        $region44: #{tpu_custom_call.1} parent=31 // pred_fallthru
          _
        // Predicated region
        $region45: #{tpu_custom_call.1} parent=31 // pred_check
          %p395 = pneg %p126
        $region46: #{tpu_custom_call.1} parent=31 // pred_check_branch
          %397 = sbr.rel (%p395) target = $region48
        $region47: #{tpu_custom_call.1} parent=31 // pred_region
          %p398 = scmp.lt.s32.totalorder %s28, 3
          %s399 = scalar_select %p398, %s28, 3
          %s400 = smul.addr %s399, 8
          %s401 = smul.addr %s400, 8
          %s402 = scalar_lea.vmem %s3, %s401
        $region48: #{tpu_custom_call.1} parent=31 // pred_fallthru
          _
        // Predicated region
        $region49: #{tpu_custom_call.1} parent=31 // pred_check
          %p403 = pneg %p152
        $region50: #{tpu_custom_call.1} parent=31 // pred_check_branch
          %405 = sbr.rel (%p403) target = $region52
        $region51: #{tpu_custom_call.1} parent=31 // pred_region
          %s406 = sand.u32 %s142, 1
          %s407 = scalar_lea.sflag [#allocation3], %s406
          %s408 = sand.u32 %s142, 1
          %s409 = smul.addr %s408, 32
          %s410 = scalar_lea.vmem [#allocation2], %s409
          %s412 = ssub.s32 512, 512
          %413 = vsyncadd %s407, %s412
          %s414 = smul.addr %s28, 4
          %s415 = smul.addr %s414, 128
          %s416 = scalar_lea.hbm %s4, %s415
          %s417 = sshll.u32 %s410, 4
          %s418 = int_to_ptr.vmem [resolvable:$true] %s417
          %423 = dma.hbm_to_vmem [thread:$0]  %s416, 512, %s418, %s407, 128, 128, 8
        $region52: #{tpu_custom_call.1} parent=31 // pred_fallthru
          _
        // Predicated region
        $region53: #{tpu_custom_call.1} parent=31 // pred_check
          %p424 = pneg %p178
        $region54: #{tpu_custom_call.1} parent=31 // pred_check_branch
          %426 = sbr.rel (%p424) target = $region56
        $region55: #{tpu_custom_call.1} parent=31 // pred_region
          %p427 = scmp.lt.s32.totalorder %s28, 3
          %s428 = scalar_select %p427, %s28, 3
          %s429 = smul.addr %s428, 8
          %s430 = smul.addr %s429, 8
          %s431 = scalar_lea.vmem %s5, %s430
        $region56: #{tpu_custom_call.1} parent=31 // pred_fallthru
          _
      $region32: #{tpu_custom_call.1} parent=5 // pred_fallthru
        _
      %p432 = scmp.le.s32.totalorder 1, %s28
      %p433 = scmp.lt.s32.totalorder %s28, 5
      %p434 = pnand %p432, %p433
      %p435 = pneg %p434
      // Predicated region
      $region57: #{tpu_custom_call.1} parent=5 // pred_check
        _
      $region58: #{tpu_custom_call.1} parent=5 // pred_check_branch
        %437 = sbr.rel (%p434) target = $region60
      $region59: #{tpu_custom_call.1} parent=5 // pred_region
        %s438 = ssub.s32 %s28, 1
        %s439 = sand.u32 %s145, 1
        %s440 = scalar_lea.sflag [#allocation3], %s439
        %s441 = sand.u32 %s145, 1
        %s442 = smul.addr %s441, 32
        %s443 = scalar_lea.vmem [#allocation2], %s442
        // Predicated region
        $region61: #{tpu_custom_call.1} parent=59 // pred_check
          %p444 = pneg %p158
        $region62: #{tpu_custom_call.1} parent=59 // pred_check_branch
          %446 = sbr.rel (%p444) target = $region64
        $region63: #{tpu_custom_call.1} parent=59 // pred_region
          %447 = dma.done %s440, 512
        $region64: #{tpu_custom_call.1} parent=59 // pred_fallthru
          _
        // Predicated region
        $region65: #{tpu_custom_call.1} parent=59 // pred_check
          %p448 = pneg %p205
        $region66: #{tpu_custom_call.1} parent=59 // pred_check_branch
          %450 = sbr.rel (%p448) target = $region68
        $region67: #{tpu_custom_call.1} parent=59 // pred_region
          %451 = dma.done [#allocation6], 2048
        $region68: #{tpu_custom_call.1} parent=59 // pred_fallthru
          _
        // Predicated region
        $region69: #{tpu_custom_call.1} parent=59 // pred_check
          %p452 = pneg %p247
        $region70: #{tpu_custom_call.1} parent=59 // pred_check_branch
          %454 = sbr.rel (%p452) target = $region72
        $region71: #{tpu_custom_call.1} parent=59 // pred_region
          %455 = dma.done [#allocation6], 2048
        $region72: #{tpu_custom_call.1} parent=59 // pred_fallthru
          _
        %p456 = scmp.lt.s32.totalorder %s33, 3
        %s457 = scalar_select %p456, %s33, 3
        %s458 = smul.addr %s457, 8
        %s459 = smul.addr %s458, 8
        %s460 = scalar_lea.vmem %s0, %s459
        %p461 = pneg %p54
        %p462 = pneg %p51
        %p463 = scmp.lt.s32.totalorder %s33, 3
        %s464 = scalar_select %p463, %s33, 3
        %s465 = smul.addr %s464, 8
        %s466 = smul.addr %s465, 8
        %s467 = scalar_lea.vmem %s1, %s466
        %p468 = pneg %p80
        %p469 = pneg %p77
        %p470 = scmp.lt.s32.totalorder %s33, 3
        %s471 = scalar_select %p470, %s33, 3
        %s472 = smul.addr %s471, 2
        %s473 = smul.addr %s472, 8
        %s474 = scalar_lea.vmem %s2, %s473
        %p475 = pneg %p106
        %p476 = pneg %p103
        %p477 = scmp.lt.s32.totalorder %s33, 3
        %s478 = scalar_select %p477, %s33, 3
        %s479 = smul.addr %s478, 8
        %s480 = smul.addr %s479, 8
        %s481 = scalar_lea.vmem %s3, %s480
        %p482 = pneg %p132
        %p483 = pneg %p129
        %s484 = sand.u32 %s145, 1
        %s485 = scalar_lea.sflag [#allocation3], %s484
        %s486 = sand.u32 %s145, 1
        %s487 = smul.addr %s486, 32
        %s488 = scalar_lea.vmem [#allocation2], %s487
        %p489 = pneg %p158
        %p490 = pneg %p155
        %p491 = scmp.lt.s32.totalorder %s33, 3
        %s492 = scalar_select %p491, %s33, 3
        %s493 = smul.addr %s492, 8
        %s494 = smul.addr %s493, 8
        %s495 = scalar_lea.vmem %s5, %s494
        %p496 = pneg %p184
        %p497 = pneg %p181
        %p498 = pneg %p205
        %p499 = pneg %p202
        %p500 = pneg %p226
        %p501 = pneg %p223
        %p502 = pneg %p247
        %p503 = pneg %p244
        %p504 = pneg %p268
        %p505 = pneg %p265
        %p506 = pneg %p294
        %p507 = pneg %p291
        %s508 = sand.u32 %s281, 1
        %s509 = scalar_lea.sflag [#allocation4], %s508
        %s510 = sand.u32 %s281, 1
        %s511 = smul.addr %s510, 16
        %s512 = scalar_lea.vmem [#allocation8], %s511
        %p513 = pneg %p320
        %p514 = pneg %p317
        %s515 = sand.u32 %s307, 1
        %s516 = scalar_lea.sflag [#allocation10], %s515
        %s517 = sand.u32 %s307, 1
        %s518 = smul.addr %s517, 64
        %s519 = scalar_lea.vmem [#allocation9], %s518
        %p520 = scmp.lt.s32.totalorder %s33, 3
        %s521 = scalar_select %p520, %s33, 3
        %s522 = smul.addr %s521, 8
        %s523 = smul.addr %s522, 8
        %s524 = scalar_lea.vmem %s0, %s523
        %p525 = scmp.lt.s32.totalorder %s33, 3
        %s526 = scalar_select %p525, %s33, 3
        %s527 = smul.addr %s526, 8
        %s528 = smul.addr %s527, 8
        %s529 = scalar_lea.vmem %s1, %s528
        %p530 = scmp.lt.s32.totalorder %s33, 3
        %s531 = scalar_select %p530, %s33, 3
        %s532 = smul.addr %s531, 2
        %s533 = smul.addr %s532, 8
        %s534 = scalar_lea.vmem %s2, %s533
        %p535 = scmp.lt.s32.totalorder %s33, 3
        %s536 = scalar_select %p535, %s33, 3
        %s537 = smul.addr %s536, 8
        %s538 = smul.addr %s537, 8
        %s539 = scalar_lea.vmem %s3, %s538
        %p540 = scmp.lt.s32.totalorder %s33, 3
        %s541 = scalar_select %p540, %s33, 3
        %s542 = smul.addr %s541, 8
        %s543 = smul.addr %s542, 8
        %s544 = scalar_lea.vmem %s5, %s543
        %v545 = vld [vmem:[%s524] sm:$0xff]
        %v546 = vld [vmem:[%s524 + $0x8] sm:$0xff]
        %v547 = vld [vmem:[%s524 + $0x10] sm:$0xff]
        %v548 = vld [vmem:[%s524 + $0x18] sm:$0xff]
        %v549 = vld [vmem:[%s524 + $0x20] sm:$0xff]
        %v550 = vld [vmem:[%s524 + $0x28] sm:$0xff]
        %v551 = vld [vmem:[%s524 + $0x30] sm:$0xff]
        %v552 = vld [vmem:[%s524 + $0x38] sm:$0xff]
        %v553 = vld [vmem:[%s534] sm:$0xff]
        %v554 = vld [vmem:[%s534 + $0x8] sm:$0xff]
        %vm555 = vcmask 523264
        %v557 = vsel %vm555, %v553, 0
        %v560 = vsel %vm555, %v554, 0
        %562 = vmatprep.subr.mxu0 0.0
        %563 = vmatpush1.msra.mxu0 %v545
        %564 = vmatprep.subr.mxu0 0.0
        %565 = vmatpush1.msra.mxu0 %v546
        %566 = vmatprep.subr.mxu0 0.0
        %567 = vmatpush1.msra.mxu0 %v547
        %568 = vmatprep.subr.mxu0 0.0
        %569 = vmatpush1.msra.mxu0 %v548
        %570 = vmatprep.subr.mxu0 0.0
        %571 = vmatpush1.msra.mxu0 %v549
        %572 = vmatprep.subr.mxu0 0.0
        %573 = vmatpush1.msra.mxu0 %v550
        %574 = vmatprep.subr.mxu0 0.0
        %575 = vmatpush1.msra.mxu0 %v551
        %576 = vmatprep.subr.mxu0 0.0
        %577 = vmatpush1.msra.mxu0 %v552
        %578 = vmatprep.subr.mxu0 0.0
        %579 = vmatpush1.msra.mxu0 0.0
        %580 = vmatprep.subr.mxu0 0.0
        %581 = vmatpush1.msra.mxu0 0.0
        %582 = vmatprep.subr.mxu0 0.0
        %583 = vmatpush1.msra.mxu0 0.0
        %584 = vmatprep.subr.mxu0 0.0
        %585 = vmatpush1.msra.mxu0 0.0
        %586 = vmatprep.subr.mxu0 0.0
        %587 = vmatpush1.msra.mxu0 0.0
        %588 = vmatprep.subr.mxu0 0.0
        %589 = vmatpush1.msra.mxu0 0.0
        %590 = vmatprep.subr.mxu0 0.0
        %591 = vmatpush1.msra.mxu0 0.0
        %592 = vmatprep.subr.mxu0 0.0
        %593 = vmatpush1.msra.mxu0 0.0
        %594 = vmatprep.subr.mxu0 0.0
        %595 = vmatpush1.msra.mxu0 0.0
        %596 = vmatprep.subr.mxu0 0.0
        %597 = vmatpush1.msra.mxu0 0.0
        %598 = vmatprep.subr.mxu0 0.0
        %599 = vmatpush1.msra.mxu0 0.0
        %600 = vmatprep.subr.mxu0 0.0
        %601 = vmatpush1.msra.mxu0 0.0
        %602 = vmatprep.subr.mxu0 0.0
        %603 = vmatpush1.msra.mxu0 0.0
        %604 = vmatprep.subr.mxu0 0.0
        %605 = vmatpush1.msra.mxu0 0.0
        %606 = vmatprep.subr.mxu0 0.0
        %607 = vmatpush1.msra.mxu0 0.0
        %608 = vmatprep.subr.mxu0 0.0
        %609 = vmatpush1.msra.mxu0 0.0
        %610 = vmatprep.subr.mxu0 0.0
        %611 = vmatpush1.msra.mxu0 0.0
        %612 = vmatprep.subr.mxu0 0.0
        %613 = vmatpush1.msra.mxu0 0.0
        %614 = vmatprep.subr.mxu0 0.0
        %615 = vmatpush1.msra.mxu0 0.0
        %616 = vmatprep.subr.mxu0 0.0
        %617 = vmatpush1.msra.mxu0 0.0
        %618 = vmatprep.subr.mxu0 0.0
        %619 = vmatpush1.msra.mxu0 0.0
        %620 = vmatprep.subr.mxu0 0.0
        %621 = vmatpush1.msra.mxu0 0.0
        %622 = vmatprep.subr.mxu0 0.0
        %623 = vmatpush1.msra.mxu0 0.0
        %624 = vmatprep.subr.mxu0 0.0
        %625 = vmatpush1.msra.mxu0 0.0
        %626 = vmatprep.mubr.f32.mxu0 0.0
        %627 = vmatmul.mubr.f32.gmra.mrb[0].mxu0 %v557
        %v628 = vpop.f32.mrb[0].mxu0
        %v629 = vadd.f32 0.0, %v628
        %v630 = vpop.f32.mrb[0].mxu0
        %631 = vmatprep.mubr.f32.mxu0 0.0
        %632 = vmatmul.mubr.f32.gmra.mrb[0].mxu0 %v560
        %v633 = vpop.f32.mrb[0].mxu0
        %v634 = vadd.f32 0.0, %v633
        %v635 = vpop.f32.mrb[0].mxu0
        %636 = vdwg.mxu0
        %v637 = vld [vmem:[#allocation5] sm:$0xff]
        %v638 = vld [vmem:[#allocation5 + $0x8] sm:$0xff]
        %v639 = vld [vmem:[#allocation5 + $0x10] sm:$0xff]
        %v640 = vld [vmem:[#allocation5 + $0x18] sm:$0xff]
        %v641 = vld [vmem:[#allocation5 + $0x20] sm:$0xff]
        %v642 = vld [vmem:[#allocation5 + $0x28] sm:$0xff]
        %v643 = vld [vmem:[#allocation5 + $0x30] sm:$0xff]
        %v644 = vld [vmem:[#allocation5 + $0x38] sm:$0xff]
        %v645 = vld [vmem:[#allocation5 + $0x40] sm:$0xff]
        %v646 = vld [vmem:[#allocation5 + $0x48] sm:$0xff]
        %v647 = vld [vmem:[#allocation5 + $0x50] sm:$0xff]
        %v648 = vld [vmem:[#allocation5 + $0x58] sm:$0xff]
        %v649 = vld [vmem:[#allocation5 + $0x60] sm:$0xff]
        %v650 = vld [vmem:[#allocation5 + $0x68] sm:$0xff]
        %v651 = vld [vmem:[#allocation5 + $0x70] sm:$0xff]
        %v652 = vld [vmem:[#allocation5 + $0x78] sm:$0xff]
        %v653 = vld [vmem:[%s7] sm:$0x1]
        %v655 = vlaneseq
        %v656 = vshrl.u32 %v655, 7
        %v657 = vsub.s32 0, %v656
        %v658 = vrot.slane %v653, %v657
        %660 = vmatprep.subr.mxu0 0.0
        %661 = vmatpush1.msra.mxu0 %v637
        %662 = vmatprep.subr.mxu0 0.0
        %663 = vmatpush1.msra.mxu0 %v638
        %664 = vmatprep.subr.mxu0 0.0
        %665 = vmatpush1.msra.mxu0 %v639
        %666 = vmatprep.subr.mxu0 0.0
        %667 = vmatpush1.msra.mxu0 %v640
        %668 = vmatprep.subr.mxu0 0.0
        %669 = vmatpush1.msra.mxu0 %v641
        %670 = vmatprep.subr.mxu0 0.0
        %671 = vmatpush1.msra.mxu0 %v642
        %672 = vmatprep.subr.mxu0 0.0
        %673 = vmatpush1.msra.mxu0 %v643
        %674 = vmatprep.subr.mxu0 0.0
        %675 = vmatpush1.msra.mxu0 %v644
        %676 = vmatprep.subr.mxu0 0.0
        %677 = vmatpush1.msra.mxu0 %v645
        %678 = vmatprep.subr.mxu0 0.0
        %679 = vmatpush1.msra.mxu0 %v646
        %680 = vmatprep.subr.mxu0 0.0
        %681 = vmatpush1.msra.mxu0 %v647
        %682 = vmatprep.subr.mxu0 0.0
        %683 = vmatpush1.msra.mxu0 %v648
        %684 = vmatprep.subr.mxu0 0.0
        %685 = vmatpush1.msra.mxu0 %v649
        %686 = vmatprep.subr.mxu0 0.0
        %687 = vmatpush1.msra.mxu0 %v650
        %688 = vmatprep.subr.mxu0 0.0
        %689 = vmatpush1.msra.mxu0 %v651
        %690 = vmatprep.subr.mxu0 0.0
        %691 = vmatpush1.msra.mxu0 %v652
        %692 = vmatprep.subr.mxu0 0.0
        %693 = vmatpush1.msra.mxu0 0.0
        %694 = vmatprep.subr.mxu0 0.0
        %695 = vmatpush1.msra.mxu0 0.0
        %696 = vmatprep.subr.mxu0 0.0
        %697 = vmatpush1.msra.mxu0 0.0
        %698 = vmatprep.subr.mxu0 0.0
        %699 = vmatpush1.msra.mxu0 0.0
        %700 = vmatprep.subr.mxu0 0.0
        %701 = vmatpush1.msra.mxu0 0.0
        %702 = vmatprep.subr.mxu0 0.0
        %703 = vmatpush1.msra.mxu0 0.0
        %704 = vmatprep.subr.mxu0 0.0
        %705 = vmatpush1.msra.mxu0 0.0
        %706 = vmatprep.subr.mxu0 0.0
        %707 = vmatpush1.msra.mxu0 0.0
        %708 = vmatprep.subr.mxu0 0.0
        %709 = vmatpush1.msra.mxu0 0.0
        %710 = vmatprep.subr.mxu0 0.0
        %711 = vmatpush1.msra.mxu0 0.0
        %712 = vmatprep.subr.mxu0 0.0
        %713 = vmatpush1.msra.mxu0 0.0
        %714 = vmatprep.subr.mxu0 0.0
        %715 = vmatpush1.msra.mxu0 0.0
        %716 = vmatprep.subr.mxu0 0.0
        %717 = vmatpush1.msra.mxu0 0.0
        %718 = vmatprep.subr.mxu0 0.0
        %719 = vmatpush1.msra.mxu0 0.0
        %720 = vmatprep.subr.mxu0 0.0
        %721 = vmatpush1.msra.mxu0 0.0
        %722 = vmatprep.subr.mxu0 0.0
        %723 = vmatpush1.msra.mxu0 0.0
        %724 = vmatprep.mubr.f32.mxu0 0.0
        %725 = vmatmul.mubr.f32.gmra.mrb[0].mxu0 %v629
        %v726 = vpop.f32.mrb[0].mxu0
        %v727 = vadd.f32 %v658, %v726
        %v728 = vpop.f32.mrb[0].mxu0
        %729 = vmatprep.mubr.f32.mxu0 0.0
        %730 = vmatmul.mubr.f32.gmra.mrb[0].mxu0 %v634
        %v731 = vpop.f32.mrb[0].mxu0
        %v732 = vadd.f32 %v658, %v731
        %v733 = vpop.f32.mrb[0].mxu0
        %734 = vdwg.mxu0
        %v735 = vmax.f32 %v727, 0.0
        %v736 = vmax.f32 %v732, 0.0
        %v737 = vld [vmem:[%s529] sm:$0xff]
        %v738 = vld [vmem:[%s529 + $0x8] sm:$0xff]
        %v739 = vld [vmem:[%s529 + $0x10] sm:$0xff]
        %v740 = vld [vmem:[%s529 + $0x18] sm:$0xff]
        %v741 = vld [vmem:[%s529 + $0x20] sm:$0xff]
        %v742 = vld [vmem:[%s529 + $0x28] sm:$0xff]
        %v743 = vld [vmem:[%s529 + $0x30] sm:$0xff]
        %v744 = vld [vmem:[%s529 + $0x38] sm:$0xff]
        %vm745 = vcmask 130048
        %v747 = vsel %vm745, %v737, 0
        %v750 = vsel %vm745, %v738, 0
        %v753 = vsel %vm745, %v739, 0
        %v756 = vsel %vm745, %v740, 0
        %v759 = vsel %vm745, %v741, 0
        %v762 = vsel %vm745, %v742, 0
        %v765 = vsel %vm745, %v743, 0
        %v768 = vsel %vm745, %v744, 0
        %770 = vmatprep.subr.mxu0 0.0
        %771 = vmatpush1.msra.mxu0 %v735
        %772 = vmatprep.subr.mxu0 0.0
        %773 = vmatpush1.msra.mxu0 %v736
        %774 = vmatprep.subr.mxu0 0.0
        %775 = vmatpush1.msra.mxu0 0.0
        %776 = vmatprep.subr.mxu0 0.0
        %777 = vmatpush1.msra.mxu0 0.0
        %778 = vmatprep.subr.mxu0 0.0
        %779 = vmatpush1.msra.mxu0 0.0
        %780 = vmatprep.subr.mxu0 0.0
        %781 = vmatpush1.msra.mxu0 0.0
        %782 = vmatprep.subr.mxu0 0.0
        %783 = vmatpush1.msra.mxu0 0.0
        %784 = vmatprep.subr.mxu0 0.0
        %785 = vmatpush1.msra.mxu0 0.0
        %786 = vmatprep.subr.mxu0 0.0
        %787 = vmatpush1.msra.mxu0 0.0
        %788 = vmatprep.subr.mxu0 0.0
        %789 = vmatpush1.msra.mxu0 0.0
        %790 = vmatprep.subr.mxu0 0.0
        %791 = vmatpush1.msra.mxu0 0.0
        %792 = vmatprep.subr.mxu0 0.0
        %793 = vmatpush1.msra.mxu0 0.0
        %794 = vmatprep.subr.mxu0 0.0
        %795 = vmatpush1.msra.mxu0 0.0
        %796 = vmatprep.subr.mxu0 0.0
        %797 = vmatpush1.msra.mxu0 0.0
        %798 = vmatprep.subr.mxu0 0.0
        %799 = vmatpush1.msra.mxu0 0.0
        %800 = vmatprep.subr.mxu0 0.0
        %801 = vmatpush1.msra.mxu0 0.0
        %802 = vmatprep.subr.mxu0 0.0
        %803 = vmatpush1.msra.mxu0 0.0
        %804 = vmatprep.subr.mxu0 0.0
        %805 = vmatpush1.msra.mxu0 0.0
        %806 = vmatprep.subr.mxu0 0.0
        %807 = vmatpush1.msra.mxu0 0.0
        %808 = vmatprep.subr.mxu0 0.0
        %809 = vmatpush1.msra.mxu0 0.0
        %810 = vmatprep.subr.mxu0 0.0
        %811 = vmatpush1.msra.mxu0 0.0
        %812 = vmatprep.subr.mxu0 0.0
        %813 = vmatpush1.msra.mxu0 0.0
        %814 = vmatprep.subr.mxu0 0.0
        %815 = vmatpush1.msra.mxu0 0.0
        %816 = vmatprep.subr.mxu0 0.0
        %817 = vmatpush1.msra.mxu0 0.0
        %818 = vmatprep.subr.mxu0 0.0
        %819 = vmatpush1.msra.mxu0 0.0
        %820 = vmatprep.subr.mxu0 0.0
        %821 = vmatpush1.msra.mxu0 0.0
        %822 = vmatprep.subr.mxu0 0.0
        %823 = vmatpush1.msra.mxu0 0.0
        %824 = vmatprep.subr.mxu0 0.0
        %825 = vmatpush1.msra.mxu0 0.0
        %826 = vmatprep.subr.mxu0 0.0
        %827 = vmatpush1.msra.mxu0 0.0
        %828 = vmatprep.subr.mxu0 0.0
        %829 = vmatpush1.msra.mxu0 0.0
        %830 = vmatprep.subr.mxu0 0.0
        %831 = vmatpush1.msra.mxu0 0.0
        %832 = vmatprep.subr.mxu0 0.0
        %833 = vmatpush1.msra.mxu0 0.0
        %834 = vmatprep.mubr.f32.mxu0 0.0
        %835 = vmatmul.mubr.f32.gmra.mrb[0].mxu0 %v747
        %v836 = vpop.f32.mrb[0].mxu0
        %v837 = vadd.f32 0.0, %v836
        %v838 = vpop.f32.mrb[0].mxu0
        %839 = vmatprep.mubr.f32.mxu0 0.0
        %840 = vmatmul.mubr.f32.gmra.mrb[0].mxu0 %v750
        %v841 = vpop.f32.mrb[0].mxu0
        %v842 = vadd.f32 0.0, %v841
        %v843 = vpop.f32.mrb[0].mxu0
        %844 = vmatprep.mubr.f32.mxu0 0.0
        %845 = vmatmul.mubr.f32.gmra.mrb[0].mxu0 %v753
        %v846 = vpop.f32.mrb[0].mxu0
        %v847 = vadd.f32 0.0, %v846
        %v848 = vpop.f32.mrb[0].mxu0
        %849 = vmatprep.mubr.f32.mxu0 0.0
        %850 = vmatmul.mubr.f32.gmra.mrb[0].mxu0 %v756
        %v851 = vpop.f32.mrb[0].mxu0
        %v852 = vadd.f32 0.0, %v851
        %v853 = vpop.f32.mrb[0].mxu0
        %854 = vmatprep.mubr.f32.mxu0 0.0
        %855 = vmatmul.mubr.f32.gmra.mrb[0].mxu0 %v759
        %v856 = vpop.f32.mrb[0].mxu0
        %v857 = vadd.f32 0.0, %v856
        %v858 = vpop.f32.mrb[0].mxu0
        %859 = vmatprep.mubr.f32.mxu0 0.0
        %860 = vmatmul.mubr.f32.gmra.mrb[0].mxu0 %v762
        %v861 = vpop.f32.mrb[0].mxu0
        %v862 = vadd.f32 0.0, %v861
        %v863 = vpop.f32.mrb[0].mxu0
        %864 = vmatprep.mubr.f32.mxu0 0.0
        %865 = vmatmul.mubr.f32.gmra.mrb[0].mxu0 %v765
        %v866 = vpop.f32.mrb[0].mxu0
        %v867 = vadd.f32 0.0, %v866
        %v868 = vpop.f32.mrb[0].mxu0
        %869 = vmatprep.mubr.f32.mxu0 0.0
        %870 = vmatmul.mubr.f32.gmra.mrb[0].mxu0 %v768
        %v871 = vpop.f32.mrb[0].mxu0
        %v872 = vadd.f32 0.0, %v871
        %v873 = vpop.f32.mrb[0].mxu0
        %874 = vdwg.mxu0
        %v875 = vadd.f32 %v545, %v837
        %v876 = vadd.f32 %v546, %v842
        %v877 = vadd.f32 %v547, %v847
        %v878 = vadd.f32 %v548, %v852
        %v879 = vadd.f32 %v549, %v857
        %v880 = vadd.f32 %v550, %v862
        %v881 = vadd.f32 %v551, %v867
        %v882 = vadd.f32 %v552, %v872
        %v883 = vld [vmem:[%s443] sm:$0xff]
        %v884 = vld [vmem:[%s443 + $0x8] sm:$0xff]
        %v885 = vld [vmem:[%s443 + $0x10] sm:$0xff]
        %v886 = vld [vmem:[%s443 + $0x18] sm:$0xff]
        %v888 = vsel %vm555, %v883, 0
        %v891 = vsel %vm555, %v884, 0
        %v894 = vsel %vm555, %v885, 0
        %v897 = vsel %vm555, %v886, 0
        %899 = vmatprep.subr.mxu0 0.0
        %900 = vmatpush1.msra.mxu0 %v875
        %901 = vmatprep.subr.mxu0 0.0
        %902 = vmatpush1.msra.mxu0 %v876
        %903 = vmatprep.subr.mxu0 0.0
        %904 = vmatpush1.msra.mxu0 %v877
        %905 = vmatprep.subr.mxu0 0.0
        %906 = vmatpush1.msra.mxu0 %v878
        %907 = vmatprep.subr.mxu0 0.0
        %908 = vmatpush1.msra.mxu0 %v879
        %909 = vmatprep.subr.mxu0 0.0
        %910 = vmatpush1.msra.mxu0 %v880
        %911 = vmatprep.subr.mxu0 0.0
        %912 = vmatpush1.msra.mxu0 %v881
        %913 = vmatprep.subr.mxu0 0.0
        %914 = vmatpush1.msra.mxu0 %v882
        %915 = vmatprep.subr.mxu0 0.0
        %916 = vmatpush1.msra.mxu0 0.0
        %917 = vmatprep.subr.mxu0 0.0
        %918 = vmatpush1.msra.mxu0 0.0
        %919 = vmatprep.subr.mxu0 0.0
        %920 = vmatpush1.msra.mxu0 0.0
        %921 = vmatprep.subr.mxu0 0.0
        %922 = vmatpush1.msra.mxu0 0.0
        %923 = vmatprep.subr.mxu0 0.0
        %924 = vmatpush1.msra.mxu0 0.0
        %925 = vmatprep.subr.mxu0 0.0
        %926 = vmatpush1.msra.mxu0 0.0
        %927 = vmatprep.subr.mxu0 0.0
        %928 = vmatpush1.msra.mxu0 0.0
        %929 = vmatprep.subr.mxu0 0.0
        %930 = vmatpush1.msra.mxu0 0.0
        %931 = vmatprep.subr.mxu0 0.0
        %932 = vmatpush1.msra.mxu0 0.0
        %933 = vmatprep.subr.mxu0 0.0
        %934 = vmatpush1.msra.mxu0 0.0
        %935 = vmatprep.subr.mxu0 0.0
        %936 = vmatpush1.msra.mxu0 0.0
        %937 = vmatprep.subr.mxu0 0.0
        %938 = vmatpush1.msra.mxu0 0.0
        %939 = vmatprep.subr.mxu0 0.0
        %940 = vmatpush1.msra.mxu0 0.0
        %941 = vmatprep.subr.mxu0 0.0
        %942 = vmatpush1.msra.mxu0 0.0
        %943 = vmatprep.subr.mxu0 0.0
        %944 = vmatpush1.msra.mxu0 0.0
        %945 = vmatprep.subr.mxu0 0.0
        %946 = vmatpush1.msra.mxu0 0.0
        %947 = vmatprep.subr.mxu0 0.0
        %948 = vmatpush1.msra.mxu0 0.0
        %949 = vmatprep.subr.mxu0 0.0
        %950 = vmatpush1.msra.mxu0 0.0
        %951 = vmatprep.subr.mxu0 0.0
        %952 = vmatpush1.msra.mxu0 0.0
        %953 = vmatprep.subr.mxu0 0.0
        %954 = vmatpush1.msra.mxu0 0.0
        %955 = vmatprep.subr.mxu0 0.0
        %956 = vmatpush1.msra.mxu0 0.0
        %957 = vmatprep.subr.mxu0 0.0
        %958 = vmatpush1.msra.mxu0 0.0
        %959 = vmatprep.subr.mxu0 0.0
        %960 = vmatpush1.msra.mxu0 0.0
        %961 = vmatprep.subr.mxu0 0.0
        %962 = vmatpush1.msra.mxu0 0.0
        %963 = vmatprep.mubr.f32.mxu0 0.0
        %964 = vmatmul.mubr.f32.gmra.mrb[0].mxu0 %v888
        %v965 = vpop.f32.mrb[0].mxu0
        %v966 = vadd.f32 0.0, %v965
        %v967 = vpop.f32.mrb[0].mxu0
        %968 = vmatprep.mubr.f32.mxu0 0.0
        %969 = vmatmul.mubr.f32.gmra.mrb[0].mxu0 %v891
        %v970 = vpop.f32.mrb[0].mxu0
        %v971 = vadd.f32 0.0, %v970
        %v972 = vpop.f32.mrb[0].mxu0
        %973 = vmatprep.mubr.f32.mxu0 0.0
        %974 = vmatmul.mubr.f32.gmra.mrb[0].mxu0 %v894
        %v975 = vpop.f32.mrb[0].mxu0
        %v976 = vadd.f32 0.0, %v975
        %v977 = vpop.f32.mrb[0].mxu0
        %978 = vmatprep.mubr.f32.mxu0 0.0
        %979 = vmatmul.mubr.f32.gmra.mrb[0].mxu0 %v897
        %v980 = vpop.f32.mrb[0].mxu0
        %v981 = vadd.f32 0.0, %v980
        %v982 = vpop.f32.mrb[0].mxu0
        %983 = vdwg.mxu0
        %v984 = vld [vmem:[#allocation7] sm:$0xff]
        %v985 = vld [vmem:[#allocation7 + $0x8] sm:$0xff]
        %v986 = vld [vmem:[#allocation7 + $0x10] sm:$0xff]
        %v987 = vld [vmem:[#allocation7 + $0x18] sm:$0xff]
        %v988 = vld [vmem:[#allocation7 + $0x20] sm:$0xff]
        %v989 = vld [vmem:[#allocation7 + $0x28] sm:$0xff]
        %v990 = vld [vmem:[#allocation7 + $0x30] sm:$0xff]
        %v991 = vld [vmem:[#allocation7 + $0x38] sm:$0xff]
        %v992 = vld [vmem:[#allocation7 + $0x40] sm:$0xff]
        %v993 = vld [vmem:[#allocation7 + $0x48] sm:$0xff]
        %v994 = vld [vmem:[#allocation7 + $0x50] sm:$0xff]
        %v995 = vld [vmem:[#allocation7 + $0x58] sm:$0xff]
        %v996 = vld [vmem:[#allocation7 + $0x60] sm:$0xff]
        %v997 = vld [vmem:[#allocation7 + $0x68] sm:$0xff]
        %v998 = vld [vmem:[#allocation7 + $0x70] sm:$0xff]
        %v999 = vld [vmem:[#allocation7 + $0x78] sm:$0xff]
        %1000 = vmatprep.subr.mxu0 0.0
        %1001 = vmatpush1.msra.mxu0 %v984
        %1002 = vmatprep.subr.mxu0 0.0
        %1003 = vmatpush1.msra.mxu0 %v985
        %1004 = vmatprep.subr.mxu0 0.0
        %1005 = vmatpush1.msra.mxu0 %v986
        %1006 = vmatprep.subr.mxu0 0.0
        %1007 = vmatpush1.msra.mxu0 %v987
        %1008 = vmatprep.subr.mxu0 0.0
        %1009 = vmatpush1.msra.mxu0 %v988
        %1010 = vmatprep.subr.mxu0 0.0
        %1011 = vmatpush1.msra.mxu0 %v989
        %1012 = vmatprep.subr.mxu0 0.0
        %1013 = vmatpush1.msra.mxu0 %v990
        %1014 = vmatprep.subr.mxu0 0.0
        %1015 = vmatpush1.msra.mxu0 %v991
        %1016 = vmatprep.subr.mxu0 0.0
        %1017 = vmatpush1.msra.mxu0 %v992
        %1018 = vmatprep.subr.mxu0 0.0
        %1019 = vmatpush1.msra.mxu0 %v993
        %1020 = vmatprep.subr.mxu0 0.0
        %1021 = vmatpush1.msra.mxu0 %v994
        %1022 = vmatprep.subr.mxu0 0.0
        %1023 = vmatpush1.msra.mxu0 %v995
        %1024 = vmatprep.subr.mxu0 0.0
        %1025 = vmatpush1.msra.mxu0 %v996
        %1026 = vmatprep.subr.mxu0 0.0
        %1027 = vmatpush1.msra.mxu0 %v997
        %1028 = vmatprep.subr.mxu0 0.0
        %1029 = vmatpush1.msra.mxu0 %v998
        %1030 = vmatprep.subr.mxu0 0.0
        %1031 = vmatpush1.msra.mxu0 %v999
        %1032 = vmatprep.subr.mxu0 0.0
        %1033 = vmatpush1.msra.mxu0 0.0
        %1034 = vmatprep.subr.mxu0 0.0
        %1035 = vmatpush1.msra.mxu0 0.0
        %1036 = vmatprep.subr.mxu0 0.0
        %1037 = vmatpush1.msra.mxu0 0.0
        %1038 = vmatprep.subr.mxu0 0.0
        %1039 = vmatpush1.msra.mxu0 0.0
        %1040 = vmatprep.subr.mxu0 0.0
        %1041 = vmatpush1.msra.mxu0 0.0
        %1042 = vmatprep.subr.mxu0 0.0
        %1043 = vmatpush1.msra.mxu0 0.0
        %1044 = vmatprep.subr.mxu0 0.0
        %1045 = vmatpush1.msra.mxu0 0.0
        %1046 = vmatprep.subr.mxu0 0.0
        %1047 = vmatpush1.msra.mxu0 0.0
        %1048 = vmatprep.subr.mxu0 0.0
        %1049 = vmatpush1.msra.mxu0 0.0
        %1050 = vmatprep.subr.mxu0 0.0
        %1051 = vmatpush1.msra.mxu0 0.0
        %1052 = vmatprep.subr.mxu0 0.0
        %1053 = vmatpush1.msra.mxu0 0.0
        %1054 = vmatprep.subr.mxu0 0.0
        %1055 = vmatpush1.msra.mxu0 0.0
        %1056 = vmatprep.subr.mxu0 0.0
        %1057 = vmatpush1.msra.mxu0 0.0
        %1058 = vmatprep.subr.mxu0 0.0
        %1059 = vmatpush1.msra.mxu0 0.0
        %1060 = vmatprep.subr.mxu0 0.0
        %1061 = vmatpush1.msra.mxu0 0.0
        %1062 = vmatprep.subr.mxu0 0.0
        %1063 = vmatpush1.msra.mxu0 0.0
        %1064 = vmatprep.mubr.f32.mxu0 0.0
        %1065 = vmatmul.mubr.f32.gmra.mrb[0].mxu0 %v966
        %v1066 = vpop.f32.mrb[0].mxu0
        %v1067 = vadd.f32 0.0, %v1066
        %v1068 = vpop.f32.mrb[0].mxu0
        %1069 = vmatprep.mubr.f32.mxu0 0.0
        %1070 = vmatmul.mubr.f32.gmra.mrb[0].mxu0 %v971
        %v1071 = vpop.f32.mrb[0].mxu0
        %v1072 = vadd.f32 0.0, %v1071
        %v1073 = vpop.f32.mrb[0].mxu0
        %1074 = vmatprep.mubr.f32.mxu0 0.0
        %1075 = vmatmul.mubr.f32.gmra.mrb[0].mxu0 %v976
        %v1076 = vpop.f32.mrb[0].mxu0
        %v1077 = vadd.f32 0.0, %v1076
        %v1078 = vpop.f32.mrb[0].mxu0
        %1079 = vmatprep.mubr.f32.mxu0 0.0
        %1080 = vmatmul.mubr.f32.gmra.mrb[0].mxu0 %v981
        %v1081 = vpop.f32.mrb[0].mxu0
        %v1082 = vadd.f32 0.0, %v1081
        %v1083 = vpop.f32.mrb[0].mxu0
        %1084 = vdwg.mxu0
        %v1085 = vld [vmem:[%s539] sm:$0xff]
        %v1086 = vld [vmem:[%s539 + $0x8] sm:$0xff]
        %v1087 = vld [vmem:[%s539 + $0x10] sm:$0xff]
        %v1088 = vld [vmem:[%s539 + $0x18] sm:$0xff]
        %v1089 = vld [vmem:[%s539 + $0x20] sm:$0xff]
        %v1090 = vld [vmem:[%s539 + $0x28] sm:$0xff]
        %v1091 = vld [vmem:[%s539 + $0x30] sm:$0xff]
        %v1092 = vld [vmem:[%s539 + $0x38] sm:$0xff]
        %vm1093 = vcmask 261120
        %v1095 = vsel %vm1093, %v1085, 0
        %v1098 = vsel %vm1093, %v1086, 0
        %v1101 = vsel %vm1093, %v1087, 0
        %v1104 = vsel %vm1093, %v1088, 0
        %v1107 = vsel %vm1093, %v1089, 0
        %v1110 = vsel %vm1093, %v1090, 0
        %v1113 = vsel %vm1093, %v1091, 0
        %v1116 = vsel %vm1093, %v1092, 0
        %1118 = vmatprep.subr.mxu0 0.0
        %1119 = vmatpush1.msra.mxu0 %v1067
        %1120 = vmatprep.subr.mxu0 0.0
        %1121 = vmatpush1.msra.mxu0 %v1072
        %1122 = vmatprep.subr.mxu0 0.0
        %1123 = vmatpush1.msra.mxu0 %v1077
        %1124 = vmatprep.subr.mxu0 0.0
        %1125 = vmatpush1.msra.mxu0 %v1082
        %1126 = vmatprep.subr.mxu0 0.0
        %1127 = vmatpush1.msra.mxu0 0.0
        %1128 = vmatprep.subr.mxu0 0.0
        %1129 = vmatpush1.msra.mxu0 0.0
        %1130 = vmatprep.subr.mxu0 0.0
        %1131 = vmatpush1.msra.mxu0 0.0
        %1132 = vmatprep.subr.mxu0 0.0
        %1133 = vmatpush1.msra.mxu0 0.0
        %1134 = vmatprep.subr.mxu0 0.0
        %1135 = vmatpush1.msra.mxu0 0.0
        %1136 = vmatprep.subr.mxu0 0.0
        %1137 = vmatpush1.msra.mxu0 0.0
        %1138 = vmatprep.subr.mxu0 0.0
        %1139 = vmatpush1.msra.mxu0 0.0
        %1140 = vmatprep.subr.mxu0 0.0
        %1141 = vmatpush1.msra.mxu0 0.0
        %1142 = vmatprep.subr.mxu0 0.0
        %1143 = vmatpush1.msra.mxu0 0.0
        %1144 = vmatprep.subr.mxu0 0.0
        %1145 = vmatpush1.msra.mxu0 0.0
        %1146 = vmatprep.subr.mxu0 0.0
        %1147 = vmatpush1.msra.mxu0 0.0
        %1148 = vmatprep.subr.mxu0 0.0
        %1149 = vmatpush1.msra.mxu0 0.0
        %1150 = vmatprep.subr.mxu0 0.0
        %1151 = vmatpush1.msra.mxu0 0.0
        %1152 = vmatprep.subr.mxu0 0.0
        %1153 = vmatpush1.msra.mxu0 0.0
        %1154 = vmatprep.subr.mxu0 0.0
        %1155 = vmatpush1.msra.mxu0 0.0
        %1156 = vmatprep.subr.mxu0 0.0
        %1157 = vmatpush1.msra.mxu0 0.0
        %1158 = vmatprep.subr.mxu0 0.0
        %1159 = vmatpush1.msra.mxu0 0.0
        %1160 = vmatprep.subr.mxu0 0.0
        %1161 = vmatpush1.msra.mxu0 0.0
        %1162 = vmatprep.subr.mxu0 0.0
        %1163 = vmatpush1.msra.mxu0 0.0
        %1164 = vmatprep.subr.mxu0 0.0
        %1165 = vmatpush1.msra.mxu0 0.0
        %1166 = vmatprep.subr.mxu0 0.0
        %1167 = vmatpush1.msra.mxu0 0.0
        %1168 = vmatprep.subr.mxu0 0.0
        %1169 = vmatpush1.msra.mxu0 0.0
        %1170 = vmatprep.subr.mxu0 0.0
        %1171 = vmatpush1.msra.mxu0 0.0
        %1172 = vmatprep.subr.mxu0 0.0
        %1173 = vmatpush1.msra.mxu0 0.0
        %1174 = vmatprep.subr.mxu0 0.0
        %1175 = vmatpush1.msra.mxu0 0.0
        %1176 = vmatprep.subr.mxu0 0.0
        %1177 = vmatpush1.msra.mxu0 0.0
        %1178 = vmatprep.subr.mxu0 0.0
        %1179 = vmatpush1.msra.mxu0 0.0
        %1180 = vmatprep.subr.mxu0 0.0
        %1181 = vmatpush1.msra.mxu0 0.0
        %1182 = vmatprep.mubr.f32.mxu0 0.0
        %1183 = vmatmul.mubr.f32.gmra.mrb[0].mxu0 %v1095
        %v1184 = vpop.f32.mrb[0].mxu0
        %v1185 = vadd.f32 0.0, %v1184
        %v1186 = vpop.f32.mrb[0].mxu0
        %1187 = vmatprep.mubr.f32.mxu0 0.0
        %1188 = vmatmul.mubr.f32.gmra.mrb[0].mxu0 %v1098
        %v1189 = vpop.f32.mrb[0].mxu0
        %v1190 = vadd.f32 0.0, %v1189
        %v1191 = vpop.f32.mrb[0].mxu0
        %1192 = vmatprep.mubr.f32.mxu0 0.0
        %1193 = vmatmul.mubr.f32.gmra.mrb[0].mxu0 %v1101
        %v1194 = vpop.f32.mrb[0].mxu0
        %v1195 = vadd.f32 0.0, %v1194
        %v1196 = vpop.f32.mrb[0].mxu0
        %1197 = vmatprep.mubr.f32.mxu0 0.0
        %1198 = vmatmul.mubr.f32.gmra.mrb[0].mxu0 %v1104
        %v1199 = vpop.f32.mrb[0].mxu0
        %v1200 = vadd.f32 0.0, %v1199
        %v1201 = vpop.f32.mrb[0].mxu0
        %1202 = vmatprep.mubr.f32.mxu0 0.0
        %1203 = vmatmul.mubr.f32.gmra.mrb[0].mxu0 %v1107
        %v1204 = vpop.f32.mrb[0].mxu0
        %v1205 = vadd.f32 0.0, %v1204
        %v1206 = vpop.f32.mrb[0].mxu0
        %1207 = vmatprep.mubr.f32.mxu0 0.0
        %1208 = vmatmul.mubr.f32.gmra.mrb[0].mxu0 %v1110
        %v1209 = vpop.f32.mrb[0].mxu0
        %v1210 = vadd.f32 0.0, %v1209
        %v1211 = vpop.f32.mrb[0].mxu0
        %1212 = vmatprep.mubr.f32.mxu0 0.0
        %1213 = vmatmul.mubr.f32.gmra.mrb[0].mxu0 %v1113
        %v1214 = vpop.f32.mrb[0].mxu0
        %v1215 = vadd.f32 0.0, %v1214
        %v1216 = vpop.f32.mrb[0].mxu0
        %1217 = vmatprep.mubr.f32.mxu0 0.0
        %1218 = vmatmul.mubr.f32.gmra.mrb[0].mxu0 %v1116
        %v1219 = vpop.f32.mrb[0].mxu0
        %v1220 = vadd.f32 0.0, %v1219
        %v1221 = vpop.f32.mrb[0].mxu0
        %1222 = vdwg.mxu0
        %v1223 = vld [vmem:[%s544] sm:$0xff]
        %v1224 = vld [vmem:[%s544 + $0x8] sm:$0xff]
        %v1225 = vld [vmem:[%s544 + $0x10] sm:$0xff]
        %v1226 = vld [vmem:[%s544 + $0x18] sm:$0xff]
        %v1227 = vld [vmem:[%s544 + $0x20] sm:$0xff]
        %v1228 = vld [vmem:[%s544 + $0x28] sm:$0xff]
        %v1229 = vld [vmem:[%s544 + $0x30] sm:$0xff]
        %v1230 = vld [vmem:[%s544 + $0x38] sm:$0xff]
        %v1231 = vld [vmem:[%s9] sm:$0x1]
        %v1233 = vlaneseq
        %v1234 = vshrl.u32 %v1233, 7
        %v1235 = vsub.s32 0, %v1234
        %v1236 = vrot.slane %v1231, %v1235
        %v1239 = vsel %vm555, %v1223, 0
        %v1242 = vsel %vm555, %v1224, 0
        %v1245 = vsel %vm555, %v1225, 0
        %v1248 = vsel %vm555, %v1226, 0
        %v1251 = vsel %vm555, %v1227, 0
        %v1254 = vsel %vm555, %v1228, 0
        %v1257 = vsel %vm555, %v1229, 0
        %v1260 = vsel %vm555, %v1230, 0
        %1262 = vmatprep.subr.mxu0 0.0
        %1263 = vmatpush1.msra.mxu0 %v1185
        %1264 = vmatprep.subr.mxu0 0.0
        %1265 = vmatpush1.msra.mxu0 %v1190
        %1266 = vmatprep.subr.mxu0 0.0
        %1267 = vmatpush1.msra.mxu0 %v1195
        %1268 = vmatprep.subr.mxu0 0.0
        %1269 = vmatpush1.msra.mxu0 %v1200
        %1270 = vmatprep.subr.mxu0 0.0
        %1271 = vmatpush1.msra.mxu0 %v1205
        %1272 = vmatprep.subr.mxu0 0.0
        %1273 = vmatpush1.msra.mxu0 %v1210
        %1274 = vmatprep.subr.mxu0 0.0
        %1275 = vmatpush1.msra.mxu0 %v1215
        %1276 = vmatprep.subr.mxu0 0.0
        %1277 = vmatpush1.msra.mxu0 %v1220
        %1278 = vmatprep.subr.mxu0 0.0
        %1279 = vmatpush1.msra.mxu0 0.0
        %1280 = vmatprep.subr.mxu0 0.0
        %1281 = vmatpush1.msra.mxu0 0.0
        %1282 = vmatprep.subr.mxu0 0.0
        %1283 = vmatpush1.msra.mxu0 0.0
        %1284 = vmatprep.subr.mxu0 0.0
        %1285 = vmatpush1.msra.mxu0 0.0
        %1286 = vmatprep.subr.mxu0 0.0
        %1287 = vmatpush1.msra.mxu0 0.0
        %1288 = vmatprep.subr.mxu0 0.0
        %1289 = vmatpush1.msra.mxu0 0.0
        %1290 = vmatprep.subr.mxu0 0.0
        %1291 = vmatpush1.msra.mxu0 0.0
        %1292 = vmatprep.subr.mxu0 0.0
        %1293 = vmatpush1.msra.mxu0 0.0
        %1294 = vmatprep.subr.mxu0 0.0
        %1295 = vmatpush1.msra.mxu0 0.0
        %1296 = vmatprep.subr.mxu0 0.0
        %1297 = vmatpush1.msra.mxu0 0.0
        %1298 = vmatprep.subr.mxu0 0.0
        %1299 = vmatpush1.msra.mxu0 0.0
        %1300 = vmatprep.subr.mxu0 0.0
        %1301 = vmatpush1.msra.mxu0 0.0
        %1302 = vmatprep.subr.mxu0 0.0
        %1303 = vmatpush1.msra.mxu0 0.0
        %1304 = vmatprep.subr.mxu0 0.0
        %1305 = vmatpush1.msra.mxu0 0.0
        %1306 = vmatprep.subr.mxu0 0.0
        %1307 = vmatpush1.msra.mxu0 0.0
        %1308 = vmatprep.subr.mxu0 0.0
        %1309 = vmatpush1.msra.mxu0 0.0
        %1310 = vmatprep.subr.mxu0 0.0
        %1311 = vmatpush1.msra.mxu0 0.0
        %1312 = vmatprep.subr.mxu0 0.0
        %1313 = vmatpush1.msra.mxu0 0.0
        %1314 = vmatprep.subr.mxu0 0.0
        %1315 = vmatpush1.msra.mxu0 0.0
        %1316 = vmatprep.subr.mxu0 0.0
        %1317 = vmatpush1.msra.mxu0 0.0
        %1318 = vmatprep.subr.mxu0 0.0
        %1319 = vmatpush1.msra.mxu0 0.0
        %1320 = vmatprep.subr.mxu0 0.0
        %1321 = vmatpush1.msra.mxu0 0.0
        %1322 = vmatprep.subr.mxu0 0.0
        %1323 = vmatpush1.msra.mxu0 0.0
        %1324 = vmatprep.subr.mxu0 0.0
        %1325 = vmatpush1.msra.mxu0 0.0
        %1326 = vmatprep.mubr.f32.mxu0 0.0
        %1327 = vmatmul.mubr.f32.gmra.mrb[0].mxu0 %v1239
        %v1328 = vpop.f32.mrb[0].mxu0
        %v1329 = vadd.f32 %v1236, %v1328
        %v1330 = vpop.f32.mrb[0].mxu0
        %1331 = vmatprep.mubr.f32.mxu0 0.0
        %1332 = vmatmul.mubr.f32.gmra.mrb[0].mxu0 %v1242
        %v1333 = vpop.f32.mrb[0].mxu0
        %v1334 = vadd.f32 %v1236, %v1333
        %v1335 = vpop.f32.mrb[0].mxu0
        %1336 = vmatprep.mubr.f32.mxu0 0.0
        %1337 = vmatmul.mubr.f32.gmra.mrb[0].mxu0 %v1245
        %v1338 = vpop.f32.mrb[0].mxu0
        %v1339 = vadd.f32 %v1236, %v1338
        %v1340 = vpop.f32.mrb[0].mxu0
        %1341 = vmatprep.mubr.f32.mxu0 0.0
        %1342 = vmatmul.mubr.f32.gmra.mrb[0].mxu0 %v1248
        %v1343 = vpop.f32.mrb[0].mxu0
        %v1344 = vadd.f32 %v1236, %v1343
        %v1345 = vpop.f32.mrb[0].mxu0
        %1346 = vmatprep.mubr.f32.mxu0 0.0
        %1347 = vmatmul.mubr.f32.gmra.mrb[0].mxu0 %v1251
        %v1348 = vpop.f32.mrb[0].mxu0
        %v1349 = vadd.f32 %v1236, %v1348
        %v1350 = vpop.f32.mrb[0].mxu0
        %1351 = vmatprep.mubr.f32.mxu0 0.0
        %1352 = vmatmul.mubr.f32.gmra.mrb[0].mxu0 %v1254
        %v1353 = vpop.f32.mrb[0].mxu0
        %v1354 = vadd.f32 %v1236, %v1353
        %v1355 = vpop.f32.mrb[0].mxu0
        %1356 = vmatprep.mubr.f32.mxu0 0.0
        %1357 = vmatmul.mubr.f32.gmra.mrb[0].mxu0 %v1257
        %v1358 = vpop.f32.mrb[0].mxu0
        %v1359 = vadd.f32 %v1236, %v1358
        %v1360 = vpop.f32.mrb[0].mxu0
        %1361 = vmatprep.mubr.f32.mxu0 0.0
        %1362 = vmatmul.mubr.f32.gmra.mrb[0].mxu0 %v1260
        %v1363 = vpop.f32.mrb[0].mxu0
        %v1364 = vadd.f32 %v1236, %v1363
        %v1365 = vpop.f32.mrb[0].mxu0
        %1366 = vdwg.mxu0
        %1367 = vmatprep.subr.mxu0 0.0
        %1368 = vmatpush1.msra.mxu0 %v1329
        %1369 = vmatprep.subr.mxu0 0.0
        %1370 = vmatpush1.msra.mxu0 %v1334
        %1371 = vmatprep.subr.mxu0 0.0
        %1372 = vmatpush1.msra.mxu0 %v1339
        %1373 = vmatprep.subr.mxu0 0.0
        %1374 = vmatpush1.msra.mxu0 %v1344
        %1375 = vmatprep.subr.mxu0 0.0
        %1376 = vmatpush1.msra.mxu0 %v1349
        %1377 = vmatprep.subr.mxu0 0.0
        %1378 = vmatpush1.msra.mxu0 %v1354
        %1379 = vmatprep.subr.mxu0 0.0
        %1380 = vmatpush1.msra.mxu0 %v1359
        %1381 = vmatprep.subr.mxu0 0.0
        %1382 = vmatpush1.msra.mxu0 %v1364
        %1383 = vmatprep.subr.mxu0 0.0
        %1384 = vmatpush1.msra.mxu0 0.0
        %1385 = vmatprep.subr.mxu0 0.0
        %1386 = vmatpush1.msra.mxu0 0.0
        %1387 = vmatprep.subr.mxu0 0.0
        %1388 = vmatpush1.msra.mxu0 0.0
        %1389 = vmatprep.subr.mxu0 0.0
        %1390 = vmatpush1.msra.mxu0 0.0
        %1391 = vmatprep.subr.mxu0 0.0
        %1392 = vmatpush1.msra.mxu0 0.0
        %1393 = vmatprep.subr.mxu0 0.0
        %1394 = vmatpush1.msra.mxu0 0.0
        %1395 = vmatprep.subr.mxu0 0.0
        %1396 = vmatpush1.msra.mxu0 0.0
        %1397 = vmatprep.subr.mxu0 0.0
        %1398 = vmatpush1.msra.mxu0 0.0
        %1399 = vmatprep.subr.mxu0 0.0
        %1400 = vmatpush1.msra.mxu0 0.0
        %1401 = vmatprep.subr.mxu0 0.0
        %1402 = vmatpush1.msra.mxu0 0.0
        %1403 = vmatprep.subr.mxu0 0.0
        %1404 = vmatpush1.msra.mxu0 0.0
        %1405 = vmatprep.subr.mxu0 0.0
        %1406 = vmatpush1.msra.mxu0 0.0
        %1407 = vmatprep.subr.mxu0 0.0
        %1408 = vmatpush1.msra.mxu0 0.0
        %1409 = vmatprep.subr.mxu0 0.0
        %1410 = vmatpush1.msra.mxu0 0.0
        %1411 = vmatprep.subr.mxu0 0.0
        %1412 = vmatpush1.msra.mxu0 0.0
        %1413 = vmatprep.subr.mxu0 0.0
        %1414 = vmatpush1.msra.mxu0 0.0
        %1415 = vmatprep.subr.mxu0 0.0
        %1416 = vmatpush1.msra.mxu0 0.0
        %1417 = vmatprep.subr.mxu0 0.0
        %1418 = vmatpush1.msra.mxu0 0.0
        %1419 = vmatprep.subr.mxu0 0.0
        %1420 = vmatpush1.msra.mxu0 0.0
        %1421 = vmatprep.subr.mxu0 0.0
        %1422 = vmatpush1.msra.mxu0 0.0
        %1423 = vmatprep.subr.mxu0 0.0
        %1424 = vmatpush1.msra.mxu0 0.0
        %1425 = vmatprep.subr.mxu0 0.0
        %1426 = vmatpush1.msra.mxu0 0.0
        %1427 = vmatprep.subr.mxu0 0.0
        %1428 = vmatpush1.msra.mxu0 0.0
        %1429 = vmatprep.subr.mxu0 0.0
        %1430 = vmatpush1.msra.mxu0 0.0
        %1431 = vmatprep.mubr.f32.mxu0 0.0
        %1432 = vmatmul.mubr.f32.gmra.mrb[0].mxu0 %v557
        %v1433 = vpop.f32.mrb[0].mxu0
        %v1434 = vadd.f32 0.0, %v1433
        %v1435 = vpop.f32.mrb[0].mxu0
        %1436 = vmatprep.mubr.f32.mxu0 0.0
        %1437 = vmatmul.mubr.f32.gmra.mrb[0].mxu0 %v560
        %v1438 = vpop.f32.mrb[0].mxu0
        %v1439 = vadd.f32 0.0, %v1438
        %v1440 = vpop.f32.mrb[0].mxu0
        %1441 = vdwg.mxu0
        %1442 = vst [vmem:[%s512] sm:$0xff] %v1434
        %1443 = vst [vmem:[%s512 + $0x8] sm:$0xff] %v1439
        %1444 = vst [vmem:[%s519] sm:$0xff] %v1329
        %1445 = vst [vmem:[%s519 + $0x8] sm:$0xff] %v1334
        %1446 = vst [vmem:[%s519 + $0x10] sm:$0xff] %v1339
        %1447 = vst [vmem:[%s519 + $0x18] sm:$0xff] %v1344
        %1448 = vst [vmem:[%s519 + $0x20] sm:$0xff] %v1349
        %1449 = vst [vmem:[%s519 + $0x28] sm:$0xff] %v1354
        %1450 = vst [vmem:[%s519 + $0x30] sm:$0xff] %v1359
        %1451 = vst [vmem:[%s519 + $0x38] sm:$0xff] %v1364
        %s1452 = sand.u32 %s281, 1
        %s1453 = scalar_lea.sflag [#allocation4], %s1452
        %s1454 = sand.u32 %s281, 1
        %s1455 = smul.addr %s1454, 16
        %s1456 = scalar_lea.vmem [#allocation8], %s1455
        %s1457 = sand.u32 %s307, 1
        %s1458 = scalar_lea.sflag [#allocation10], %s1457
        %s1459 = sand.u32 %s307, 1
        %s1460 = smul.addr %s1459, 64
        %s1461 = scalar_lea.vmem [#allocation9], %s1460
        // Predicated region
        $region73: #{tpu_custom_call.1} parent=59 // pred_check
          %p1462 = pneg %p291
        $region74: #{tpu_custom_call.1} parent=59 // pred_check_branch
          %1464 = sbr.rel (%p1462) target = $region76
        $region75: #{tpu_custom_call.1} parent=59 // pred_region
          %s1466 = ssub.s32 256, 256
          %1467 = vsyncadd %s1453, %s1466
          %s1468 = smul.addr %s33, 2
          %s1469 = smul.addr %s1468, 128
          %s1470 = scalar_lea.hbm %s10, %s1469
          %s1471 = sshll.u32 %s1456, 4
          %s1472 = int_to_ptr.vmem [resolvable:$true] %s1471
          %1477 = dma.vmem_to_hbm [thread:$0]  %s1472, 256, %s1470, %s1453, 128, 128, 8
        $region76: #{tpu_custom_call.1} parent=59 // pred_fallthru
          _
        // Predicated region
        $region77: #{tpu_custom_call.1} parent=59 // pred_check
          %p1478 = pneg %p317
        $region78: #{tpu_custom_call.1} parent=59 // pred_check_branch
          %1480 = sbr.rel (%p1478) target = $region80
        $region79: #{tpu_custom_call.1} parent=59 // pred_region
          %s1482 = ssub.s32 1024, 1024
          %1483 = vsyncadd %s1458, %s1482
          %s1484 = smul.addr %s33, 8
          %s1485 = smul.addr %s1484, 128
          %s1486 = scalar_lea.hbm %s11, %s1485
          %s1487 = sshll.u32 %s1461, 4
          %s1488 = int_to_ptr.vmem [resolvable:$true] %s1487
          %1493 = dma.vmem_to_hbm [thread:$0]  %s1488, 1024, %s1486, %s1458, 128, 128, 8
        $region80: #{tpu_custom_call.1} parent=59 // pred_fallthru
          _
      $region60: #{tpu_custom_call.1} parent=5 // pred_fallthru
        _
      %p1494 = scmp.le.s32.totalorder 2, %s28
      // Predicated region
      $region81: #{tpu_custom_call.1} parent=5 // pred_check
        %p1495 = pneg %p1494
      $region82: #{tpu_custom_call.1} parent=5 // pred_check_branch
        %1497 = sbr.rel (%p1495) target = $region84
      $region83: #{tpu_custom_call.1} parent=5 // pred_region
        %s1498 = ssub.s32 %s28, 2
        // Predicated region
        $region85: #{tpu_custom_call.1} parent=83 // pred_check
          %p1499 = pneg %p297
        $region86: #{tpu_custom_call.1} parent=83 // pred_check_branch
          %1501 = sbr.rel (%p1499) target = $region88
        $region87: #{tpu_custom_call.1} parent=83 // pred_region
          %s1502 = sand.u32 %s282, 1
          %s1503 = scalar_lea.sflag [#allocation4], %s1502
          %s1504 = sand.u32 %s282, 1
          %s1505 = smul.addr %s1504, 16
          %s1506 = scalar_lea.vmem [#allocation8], %s1505
          %1507 = dma.done %s1503, 256
        $region88: #{tpu_custom_call.1} parent=83 // pred_fallthru
          _
        // Predicated region
        $region89: #{tpu_custom_call.1} parent=83 // pred_check
          %p1508 = pneg %p323
        $region90: #{tpu_custom_call.1} parent=83 // pred_check_branch
          %1510 = sbr.rel (%p1508) target = $region92
        $region91: #{tpu_custom_call.1} parent=83 // pred_region
          %s1511 = sand.u32 %s308, 1
          %s1512 = scalar_lea.sflag [#allocation10], %s1511
          %s1513 = sand.u32 %s308, 1
          %s1514 = smul.addr %s1513, 64
          %s1515 = scalar_lea.vmem [#allocation9], %s1514
          %1516 = dma.done %s1512, 1024
        $region92: #{tpu_custom_call.1} parent=83 // pred_fallthru
          _
      $region84: #{tpu_custom_call.1} parent=5 // pred_fallthru
        _
    $region6: #{tpu_custom_call.1} parent=1 // loop_footer
      %s32 = sadd.s32 1, %s28
    $region7: #{tpu_custom_call.1} parent=1 // loop_footer_branch
      %27 = sbr.rel target = $region3
    $region8: #{tpu_custom_call.1} parent=1 // loop_exit
      _
    %1517 = vsyncpa [#allocation3], 1
    %s1518 = scalar_lea.sflag [#allocation3], 1
    %1519 = vsyncpa %s1518, 1
    %1520 = vsyncpa [#allocation6], 1
    %1521 = vsyncpa [#allocation4], 1
    %s1522 = scalar_lea.sflag [#allocation4], 1
    %1523 = vsyncpa %s1522, 1
    %1524 = vsyncpa [#allocation10], 1
    %s1525 = scalar_lea.sflag [#allocation10], 1
    %1526 = vsyncpa %s1525, 1

</llo_original>
